<compile_context>
chip_gen: v7x
topology: tpu7x:2x2x1
jax: 0.10.0
libtpu: 0.0.40
codegen_flags: <defaults>
</compile_context>

<pallas_src>
import math

import jax
import jax.numpy as jnp
from jax import lax
from jax.experimental import pallas as pl
from jax.experimental.pallas import tpu as pltpu


def _round_up(n: int, m: int) -> int:
    return (n + m - 1) // m * m


def cls_decoder_kernel(x_ref, w1_ref, b1_ref, w2_ref, b2_ref, o_ref):
    # Linear 1: (tb, D_in) @ (D_in, H) + (1, H)
    x = x_ref[...]
    h = jnp.dot(x, w1_ref[...], preferred_element_type=jnp.float32,
                precision=lax.Precision.HIGHEST) + b1_ref[...]
    # Exact GELU (torch.nn.GELU default): 0.5*x*(1+erf(x/sqrt(2))).
    g = 0.5 * h * (1.0 + lax.erf(h * (1.0 / math.sqrt(2.0))))
    # TODO(synk): Dropout(p=0.3) is identity at inference; training-mode
    # dropout would need pltpu.prng_seed/prng_random_bits + 1/(1-p) scaling.
    # Cast back to the parameter dtype so the MXU stays native if the model
    # runs in bf16 (no-op for float32 params).
    g = g.astype(w2_ref.dtype)
    # Linear 2: (tb, H) @ (H, D_out) + (1, D_out)
    out = jnp.dot(g, w2_ref[...], preferred_element_type=jnp.float32,
                  precision=lax.Precision.HIGHEST) + b2_ref[...]
    o_ref[...] = out.astype(o_ref.dtype)


def _cls_decoder_ref(x, w1, b1, w2, b2):
    """Plain-JAX reference / small-batch fallback (same math as the kernel)."""
    h = jnp.dot(x, w1, preferred_element_type=jnp.float32,
                precision=lax.Precision.HIGHEST) + b1
    g = 0.5 * h * (1.0 + lax.erf(h * (1.0 / math.sqrt(2.0))))
    out = jnp.dot(g.astype(w2.dtype), w2, preferred_element_type=jnp.float32,
                  precision=lax.Precision.HIGHEST) + b2
    return out.astype(x.dtype)


def _cls_decoder_pallas(x, w1, b1, w2, b2, *, row_tile=4096):
    B, D_in = x.shape
    H = w1.shape[1]
    D_out = w2.shape[1]

    # Row tile: sublane-aligned, as large as requested, but force >= 2 grid
    # steps when the batch allows so both v7x TensorCores are used.
    B_pad8 = _round_up(B, 8)
    tb = max(8, min(_round_up(row_tile, 8), B_pad8))
    if B_pad8 >= 16:
        tb = min(tb, _round_up(pl.cdiv(B_pad8, 2), 8))
    B_final = _round_up(B_pad8, tb)

    # Pad the batch only if the tile does not divide it (zeros; sliced off).
    xp = x if B_final == B else jnp.pad(x, ((0, B_final - B), (0, 0)))

    act_bytes = jnp.dtype(x.dtype).itemsize
    par_bytes = jnp.dtype(w1.dtype).itemsize
    cost = pl.CostEstimate(
        flops=2 * B_final * (D_in * H + H * D_out),
        transcendentals=B_final * H,
        bytes_accessed=int(act_bytes * B_final * (D_in + D_out)
                           + par_bytes * (w1.size + b1.size + w2.size + b2.size)),
    )

    out = pl.pallas_call(
        cls_decoder_kernel,
        out_shape=jax.ShapeDtypeStruct((B_final, D_out), x.dtype),
        grid_spec=pltpu.PrefetchScalarGridSpec(
            num_scalar_prefetch=0,
            grid=(B_final // tb,),
            in_specs=[
                # x: tiled over batch rows (double-buffered by the pipeline).
                # NOTE: (tb, 16) uses 16/128 lanes per DMA row; input traffic
                # is ~1/8 of output traffic so we deliberately do NOT repack.
                pl.BlockSpec((tb, D_in), lambda i: (i, 0)),
                # Weights/biases: constant index_map -> VMEM-resident, DMA'd
                # from HBM once. Block shapes equal full array dims (no pad).
                pl.BlockSpec((D_in, H), lambda i: (0, 0)),
                pl.BlockSpec((1, H), lambda i: (0, 0)),
                pl.BlockSpec((H, D_out), lambda i: (0, 0)),
                pl.BlockSpec((1, D_out), lambda i: (0, 0)),
            ],
            # Unpadded output block: D_out == full array dim, so no wrapper
            # pad/slice round-trip; only the last vreg per row is a masked vst.
            out_specs=pl.BlockSpec((tb, D_out), lambda i: (i, 0)),
        ),
        compiler_params=pltpu.CompilerParams(
            # Batch steps are independent -> shard across v7x's 2 TensorCores.
            dimension_semantics=("parallel",),
        ),
        cost_estimate=cost,
    )(xp, w1, b1, w2, b2)

    return out if B_final == B else out[:B]


def cls_decoder(x, w1, b1, w2, b2, *, row_tile=4096, min_pallas_rows=1024,
                force_pallas=False):
    """y = GELU(x @ w1 + b1) @ w2 + b2   (Dropout is identity at inference).

    x:  (..., D_in)        w1: (D_in, H)   b1: (1, H)
    w2: (H, D_out)         b2: (1, D_out)  ->  (..., D_out)
    Leading dims are folded into one batch dim so the MXU/grid see a real M.
    """
    lead = x.shape[:-1]
    x2 = x.reshape(-1, x.shape[-1])
    B = x2.shape[0]
    if force_pallas or B >= min_pallas_rows:
        out = _cls_decoder_pallas(x2, w1, b1, w2, b2, row_tile=row_tile)
    else:
        # Tiny batches: launch/fixed costs dwarf the ~KB of work; let XLA fuse.
        out = _cls_decoder_ref(x2, w1, b1, w2, b2)
    return out.reshape(*lead, out.shape[-1])


def xavier_normal(key, fan_in, fan_out, dtype=jnp.float32):
    # torch.nn.init.xavier_normal_: std = sqrt(2 / (fan_in + fan_out)).
    # Stored as (fan_in, fan_out) so the kernel computes x @ W directly.
    std = math.sqrt(2.0 / (fan_in + fan_out))
    return (std * jax.random.normal(key, (fan_in, fan_out))).astype(dtype)


if __name__ == "__main__":
    # args.input_size = 16 -> output_size = 16*15/2 = 120, hidden = 60
    input_size = 16
    output_size = input_size * (input_size - 1) // 2   # 120
    hidden = output_size // 2                           # 60
    batch = 64                                          # small demo batch

    key = jax.random.PRNGKey(0)
    kx, kw1, kb1, kw2, kb2 = jax.random.split(key, 5)

    x = jax.random.normal(kx, (batch, input_size), dtype=jnp.float32)

    w1 = xavier_normal(kw1, input_size, hidden)
    w2 = xavier_normal(kw2, hidden, output_size)
    # Biases are 1-D params skipped by reset_parameters (xavier only on 2-D);
    # initialize deterministically (PyTorch-style small uniform bound).
    b1 = (jax.random.uniform(kb1, (1, hidden), minval=-1.0, maxval=1.0)
          / math.sqrt(input_size)).astype(jnp.float32)
    b2 = (jax.random.uniform(kb2, (1, output_size), minval=-1.0, maxval=1.0)
          / math.sqrt(hidden)).astype(jnp.float32)

    # Force the Pallas path (the auto-dispatcher would use plain jnp at B=64).
    out = cls_decoder(x, w1, b1, w2, b2, force_pallas=True)
    jax.block_until_ready(out)

    ref = _cls_decoder_ref(x, w1, b1, w2, b2)
    assert out.shape == (batch, output_size)
    assert jnp.allclose(out, ref, atol=1e-5, rtol=1e-5), \
        float(jnp.max(jnp.abs(out - ref)))

    print("KERNEL_OK")
</pallas_src>

<mosaic_0001>
module attributes {stable_mosaic.version = 11 : i64} {
  func.func @cls_decoder_kernel(%arg0: i32, %arg1: memref<32x16xf32, #tpu.memory_space<vmem>>, %arg2: memref<16x60xf32, #tpu.memory_space<vmem>>, %arg3: memref<1x60xf32, #tpu.memory_space<vmem>>, %arg4: memref<60x120xf32, #tpu.memory_space<vmem>>, %arg5: memref<1x120xf32, #tpu.memory_space<vmem>>, %arg6: memref<32x120xf32, #tpu.memory_space<vmem>>) attributes {dimension_semantics = [#tpu.dimension_semantics<parallel>], iteration_bounds = array<i64: 2>, scalar_prefetch = 0 : i64, scratch_operands = 0 : i64, tpu.core_type = #tpu.core_type<tc>, window_params = [{transform_indices = @transform_0, window_bounds = array<i64: 32, 16>}, {pipeline_mode = #tpu.pipeline_mode<synchronous>, transform_indices = @transform_1, window_bounds = array<i64: 16, 60>}, {pipeline_mode = #tpu.pipeline_mode<synchronous>, transform_indices = @transform_2, window_bounds = array<i64: 1, 60>}, {pipeline_mode = #tpu.pipeline_mode<synchronous>, transform_indices = @transform_3, window_bounds = array<i64: 60, 120>}, {pipeline_mode = #tpu.pipeline_mode<synchronous>, transform_indices = @transform_4, window_bounds = array<i64: 1, 120>}, {transform_indices = @transform_5, window_bounds = array<i64: 32, 120>}]} {
    %c0 = arith.constant 0 : index
    %c0_0 = arith.constant 0 : index
    %0 = vector.load %arg1[%c0, %c0_0] : memref<32x16xf32, #tpu.memory_space<vmem>>, vector<32x16xf32>
    %c0_1 = arith.constant 0 : index
    %c0_2 = arith.constant 0 : index
    %1 = vector.load %arg2[%c0_1, %c0_2] : memref<16x60xf32, #tpu.memory_space<vmem>>, vector<16x60xf32>
    %cst = arith.constant dense<0.000000e+00> : vector<32x60xf32>
    %2 = tpu.matmul %0, %1, %cst {dimension_numbers = #tpu.dot_dimension_numbers<[1], [0], [0], [1], [0, 0, 1, 1], [], []>, precision = #tpu.contract_precision<fp32>} : vector<32x16xf32>, vector<16x60xf32>, vector<32x60xf32> -> vector<32x60xf32>
    %c0_3 = arith.constant 0 : index
    %c0_4 = arith.constant 0 : index
    %3 = vector.load %arg3[%c0_3, %c0_4] : memref<1x60xf32, #tpu.memory_space<vmem>>, vector<1x60xf32>
    %4 = vector.broadcast %3 : vector<1x60xf32> to vector<32x60xf32>
    %5 = arith.addf %2, %4 : vector<32x60xf32>
    %cst_5 = arith.constant 5.000000e-01 : f32
    %6 = vector.broadcast %cst_5 : f32 to vector<32x60xf32>
    %7 = arith.mulf %6, %5 : vector<32x60xf32>
    %cst_6 = arith.constant 0.707106769 : f32
    %8 = vector.broadcast %cst_6 : f32 to vector<32x60xf32>
    %9 = arith.mulf %5, %8 : vector<32x60xf32>
    %10 = math.erf %9 : vector<32x60xf32>
    %cst_7 = arith.constant 1.000000e+00 : f32
    %11 = vector.broadcast %cst_7 : f32 to vector<32x60xf32>
    %12 = arith.addf %11, %10 : vector<32x60xf32>
    %13 = arith.mulf %7, %12 : vector<32x60xf32>
    %c0_8 = arith.constant 0 : index
    %c0_9 = arith.constant 0 : index
    %14 = vector.load %arg4[%c0_8, %c0_9] : memref<60x120xf32, #tpu.memory_space<vmem>>, vector<60x120xf32>
    %cst_10 = arith.constant dense<0.000000e+00> : vector<32x120xf32>
    %15 = tpu.matmul %13, %14, %cst_10 {dimension_numbers = #tpu.dot_dimension_numbers<[1], [0], [0], [1], [0, 0, 1, 1], [], []>, precision = #tpu.contract_precision<fp32>} : vector<32x60xf32>, vector<60x120xf32>, vector<32x120xf32> -> vector<32x120xf32>
    %c0_11 = arith.constant 0 : index
    %c0_12 = arith.constant 0 : index
    %16 = vector.load %arg5[%c0_11, %c0_12] : memref<1x120xf32, #tpu.memory_space<vmem>>, vector<1x120xf32>
    %17 = vector.broadcast %16 : vector<1x120xf32> to vector<32x120xf32>
    %18 = arith.addf %15, %17 : vector<32x120xf32>
    %c0_13 = arith.constant 0 : index
    %c0_14 = arith.constant 0 : index
    %19 = vector.load %arg6[%c0_13, %c0_14] : memref<32x120xf32, #tpu.memory_space<vmem>>, vector<32x120xf32>
    tpu.vector_store %arg6[%c0_13, %c0_14], %18 {strides = array<i32>} : memref<32x120xf32, #tpu.memory_space<vmem>>, vector<32x120xf32>,
    return
  }
  func.func @transform_0(%arg0: i32) -> (i32, i32) {
    %c0_i32 = arith.constant 0 : i32
    %c0_i32_0 = arith.constant 0 : i32
    return %arg0, %c0_i32 : i32, i32
  }
  func.func @transform_1(%arg0: i32) -> (i32, i32) {
    %c0_i32 = arith.constant 0 : i32
    %c0_i32_0 = arith.constant 0 : i32
    %c0_i32_1 = arith.constant 0 : i32
    return %c0_i32, %c0_i32_0 : i32, i32
  }
  func.func @transform_2(%arg0: i32) -> (i32, i32) {
    %c0_i32 = arith.constant 0 : i32
    %c0_i32_0 = arith.constant 0 : i32
    %c0_i32_1 = arith.constant 0 : i32
    return %c0_i32, %c0_i32_0 : i32, i32
  }
  func.func @transform_3(%arg0: i32) -> (i32, i32) {
    %c0_i32 = arith.constant 0 : i32
    %c0_i32_0 = arith.constant 0 : i32
    %c0_i32_1 = arith.constant 0 : i32
    return %c0_i32, %c0_i32_0 : i32, i32
  }
  func.func @transform_4(%arg0: i32) -> (i32, i32) {
    %c0_i32 = arith.constant 0 : i32
    %c0_i32_0 = arith.constant 0 : i32
    %c0_i32_1 = arith.constant 0 : i32
    return %c0_i32, %c0_i32_0 : i32, i32
  }
  func.func @transform_5(%arg0: i32) -> (i32, i32) {
    %c0_i32 = arith.constant 0 : i32
    %c0_i32_0 = arith.constant 0 : i32
    return %arg0, %c0_i32 : i32, i32
  }
}

</mosaic_0001>

<llo_original>
// kernel: tpu_custom_call.1
$region0: #{tpu_custom_call.1}
  #allocation0 [shape = 'u32[]', space=smem, size = 0x4, offset = 0x4, fixed_abs, tag = 'smem constant byte address 0x4 - core index']
  #allocation1 [shape = 'u32[144,128]{1,0:T(1,128)}', space=vmem, size = 0x12000, scoped, tag = 'internal scratch']
  %s0 = inlined_call_operand.vmem [shape: f32[64,16], index: 0, kind: input, shape index: {}]
  %s1 = inlined_call_operand.vmem [shape: f32[16,60], index: 1, kind: input, shape index: {}]
  %s2 = inlined_call_operand.vmem [shape: f32[1,60], index: 2, kind: input, shape index: {}]
  %s3 = inlined_call_operand.vmem [shape: f32[60,120], index: 3, kind: input, shape index: {}]
  %s4 = inlined_call_operand.vmem [shape: f32[1,120], index: 4, kind: input, shape index: {}]
  %s5 = inlined_call_operand.hbm [shape: f32[64,120], index: 5, kind: output, shape index: {}]
  %s6 = sld [smem:[#allocation0]]
  $region53: #{tpu_custom_call.1} parent=0
    _
  %s8 = ssub.s32 1, %s6
  %s9 = scalar_select 0, %s8, %s6
  $region1: #{tpu_custom_call.1} parent=0
    #allocation2 [shape = 'u8[32768]{0}', space=vmem, size = 0x8000, scoped, tag = 'output window, operand 0']
    #allocation3 [shape = 's32[2]{0}', space=sflag, size = 0x8, scoped, tag = 'scoped memory for tpu_custom_call.1']
    %10 = vsyncpa [#allocation3], 0
    %s11 = scalar_lea.sflag [#allocation3], 1
    %12 = vsyncpa %s11, 0
    loop: start=0, step=1, limit=4
    $region2: #{tpu_custom_call.1} parent=1 // loop_pre_header
      _
    $region3: #{tpu_custom_call.1} parent=1 // loop_header
      %s14 = sphi 0, %s18
      %p15 = scmp.ge.s32.totalorder %s14, 4
      %s24 = sphi 0, %s26
      %s27 = sphi 0, %s24
      %s28 = sphi 0, %s27
      %s44 = sphi 0, %s28
      %s48 = sphi 0, %s48
      %s50 = sphi 0, %s48
      %s51 = sphi 0, %s50
      %s65 = sphi 0, %s51
      %s69 = sphi 0, %s69
      %s71 = sphi 0, %s69
      %s72 = sphi 0, %s71
      %s86 = sphi 0, %s72
      %s90 = sphi 0, %s90
      %s92 = sphi 0, %s90
      %s93 = sphi 0, %s92
      %s107 = sphi 0, %s93
      %s111 = sphi 0, %s111
      %s113 = sphi 0, %s111
      %s114 = sphi 0, %s113
      %s128 = sphi 0, %s114
      %s134 = sphi 0, %s136
      %s137 = sphi 0, %s134
      %s138 = sphi 0, %s137
      %s154 = sphi 0, %s138
    $region4: #{tpu_custom_call.1} parent=1 // loop_header_branch
      %17 = sbr.rel (%p15) target = $region8
    $region5: #{tpu_custom_call.1} parent=1 // loop_body
      %s19 = ssub.s32 %s14, 1
      %s20 = ssub.s32 %s14, 2
      %s21 = sadd.s32 %s14, 1
      %s22 = ssub.s32 %s14, %s21
      %p23 = scmp.eq.s32.totalorder %s22, 0
      %s25 = sadd.s32 %s24, 1
      %s26 = scalar_select %p23, %s24, %s25
      %p29 = pneg %p23
      %p30 = scmp.eq.s32.totalorder %s14, 1
      %p31 = por %p29, %p30
      %p32 = scmp.ne.s32.totalorder %s24, %s27
      %p33 = scmp.eq.s32.totalorder %s14, 0
      %p34 = por %p32, %p33
      %p35 = scmp.ne.s32.totalorder %s24, %s27
      %p36 = scmp.eq.s32.totalorder %s19, 1
      %p37 = por %p35, %p36
      %p38 = scmp.ne.s32.totalorder %s27, %s28
      %p39 = scmp.eq.s32.totalorder %s19, 0
      %p40 = por %p38, %p39
      %p41 = scmp.ne.s32.totalorder %s27, %s28
      %p42 = scmp.eq.s32.totalorder %s20, 1
      %p43 = por %p41, %p42
      %p45 = scmp.ne.s32.totalorder %s28, %s44
      %p46 = scmp.eq.s32.totalorder %s20, 0
      %p47 = por %p45, %p46
      %s49 = sadd.s32 %s48, 1
      %p52 = scmp.eq.s32.totalorder %s14, 1
      %p53 = scmp.ne.s32.totalorder %s48, %s50
      %p54 = scmp.eq.s32.totalorder %s14, 0
      %p55 = por %p53, %p54
      %p56 = scmp.ne.s32.totalorder %s48, %s50
      %p57 = scmp.eq.s32.totalorder %s19, 1
      %p58 = por %p56, %p57
      %p59 = scmp.ne.s32.totalorder %s50, %s51
      %p60 = scmp.eq.s32.totalorder %s19, 0
      %p61 = por %p59, %p60
      %p62 = scmp.ne.s32.totalorder %s50, %s51
      %p63 = scmp.eq.s32.totalorder %s20, 1
      %p64 = por %p62, %p63
      %p66 = scmp.ne.s32.totalorder %s51, %s65
      %p67 = scmp.eq.s32.totalorder %s20, 0
      %p68 = por %p66, %p67
      %s70 = sadd.s32 %s69, 1
      %p73 = scmp.eq.s32.totalorder %s14, 1
      %p74 = scmp.ne.s32.totalorder %s69, %s71
      %p75 = scmp.eq.s32.totalorder %s14, 0
      %p76 = por %p74, %p75
      %p77 = scmp.ne.s32.totalorder %s69, %s71
      %p78 = scmp.eq.s32.totalorder %s19, 1
      %p79 = por %p77, %p78
      %p80 = scmp.ne.s32.totalorder %s71, %s72
      %p81 = scmp.eq.s32.totalorder %s19, 0
      %p82 = por %p80, %p81
      %p83 = scmp.ne.s32.totalorder %s71, %s72
      %p84 = scmp.eq.s32.totalorder %s20, 1
      %p85 = por %p83, %p84
      %p87 = scmp.ne.s32.totalorder %s72, %s86
      %p88 = scmp.eq.s32.totalorder %s20, 0
      %p89 = por %p87, %p88
      %s91 = sadd.s32 %s90, 1
      %p94 = scmp.eq.s32.totalorder %s14, 1
      %p95 = scmp.ne.s32.totalorder %s90, %s92
      %p96 = scmp.eq.s32.totalorder %s14, 0
      %p97 = por %p95, %p96
      %p98 = scmp.ne.s32.totalorder %s90, %s92
      %p99 = scmp.eq.s32.totalorder %s19, 1
      %p100 = por %p98, %p99
      %p101 = scmp.ne.s32.totalorder %s92, %s93
      %p102 = scmp.eq.s32.totalorder %s19, 0
      %p103 = por %p101, %p102
      %p104 = scmp.ne.s32.totalorder %s92, %s93
      %p105 = scmp.eq.s32.totalorder %s20, 1
      %p106 = por %p104, %p105
      %p108 = scmp.ne.s32.totalorder %s93, %s107
      %p109 = scmp.eq.s32.totalorder %s20, 0
      %p110 = por %p108, %p109
      %s112 = sadd.s32 %s111, 1
      %p115 = scmp.eq.s32.totalorder %s14, 1
      %p116 = scmp.ne.s32.totalorder %s111, %s113
      %p117 = scmp.eq.s32.totalorder %s14, 0
      %p118 = por %p116, %p117
      %p119 = scmp.ne.s32.totalorder %s111, %s113
      %p120 = scmp.eq.s32.totalorder %s19, 1
      %p121 = por %p119, %p120
      %p122 = scmp.ne.s32.totalorder %s113, %s114
      %p123 = scmp.eq.s32.totalorder %s19, 0
      %p124 = por %p122, %p123
      %p125 = scmp.ne.s32.totalorder %s113, %s114
      %p126 = scmp.eq.s32.totalorder %s20, 1
      %p127 = por %p125, %p126
      %p129 = scmp.ne.s32.totalorder %s114, %s128
      %p130 = scmp.eq.s32.totalorder %s20, 0
      %p131 = por %p129, %p130
      %s132 = ssub.s32 %s14, %s21
      %p133 = scmp.eq.s32.totalorder %s132, 0
      %s135 = sadd.s32 %s134, 1
      %s136 = scalar_select %p133, %s134, %s135
      %p139 = pneg %p133
      %p140 = scmp.eq.s32.totalorder %s14, 1
      %p141 = por %p139, %p140
      %p142 = scmp.ne.s32.totalorder %s134, %s137
      %p143 = scmp.eq.s32.totalorder %s14, 0
      %p144 = por %p142, %p143
      %p145 = scmp.ne.s32.totalorder %s134, %s137
      %p146 = scmp.eq.s32.totalorder %s19, 1
      %p147 = por %p145, %p146
      %p148 = scmp.ne.s32.totalorder %s137, %s138
      %p149 = scmp.eq.s32.totalorder %s19, 0
      %p150 = por %p148, %p149
      %p151 = scmp.ne.s32.totalorder %s137, %s138
      %p152 = scmp.eq.s32.totalorder %s20, 1
      %p153 = por %p151, %p152
      %p155 = scmp.ne.s32.totalorder %s138, %s154
      %p156 = scmp.eq.s32.totalorder %s20, 0
      %p157 = por %p155, %p156
      %p158 = scmp.le.s32.totalorder 1, %s14
      %p159 = scmp.lt.s32.totalorder %s14, 3
      %p160 = pnand %p158, %p159
      %p161 = pneg %p160
      // Predicated region
      $region9: #{tpu_custom_call.1} parent=5 // pred_check
        _
      $region10: #{tpu_custom_call.1} parent=5 // pred_check_branch
        %163 = sbr.rel (%p160) target = $region12
      $region11: #{tpu_custom_call.1} parent=5 // pred_region
        %s164 = ssub.s32 %s14, 1
        // Predicated region
        $region13: #{tpu_custom_call.1} parent=11 // pred_check
          %p165 = pneg %p61
        $region14: #{tpu_custom_call.1} parent=11 // pred_check_branch
          %167 = sbr.rel (%p165) target = $region16
        $region15: #{tpu_custom_call.1} parent=11 // pred_region
          _
        $region16: #{tpu_custom_call.1} parent=11 // pred_fallthru
          _
        // Predicated region
        $region17: #{tpu_custom_call.1} parent=11 // pred_check
          %p168 = pneg %p82
        $region18: #{tpu_custom_call.1} parent=11 // pred_check_branch
          %170 = sbr.rel (%p168) target = $region20
        $region19: #{tpu_custom_call.1} parent=11 // pred_region
          _
        $region20: #{tpu_custom_call.1} parent=11 // pred_fallthru
          _
        // Predicated region
        $region21: #{tpu_custom_call.1} parent=11 // pred_check
          %p171 = pneg %p103
        $region22: #{tpu_custom_call.1} parent=11 // pred_check_branch
          %173 = sbr.rel (%p171) target = $region24
        $region23: #{tpu_custom_call.1} parent=11 // pred_region
          _
        $region24: #{tpu_custom_call.1} parent=11 // pred_fallthru
          _
        // Predicated region
        $region25: #{tpu_custom_call.1} parent=11 // pred_check
          %p174 = pneg %p124
        $region26: #{tpu_custom_call.1} parent=11 // pred_check_branch
          %176 = sbr.rel (%p174) target = $region28
        $region27: #{tpu_custom_call.1} parent=11 // pred_region
          _
        $region28: #{tpu_custom_call.1} parent=11 // pred_fallthru
          _
      $region12: #{tpu_custom_call.1} parent=5 // pred_fallthru
        _
      %p177 = scmp.lt.s32.totalorder %s14, 2
      // Predicated region
      $region29: #{tpu_custom_call.1} parent=5 // pred_check
        %p178 = pneg %p177
      $region30: #{tpu_custom_call.1} parent=5 // pred_check_branch
        %180 = sbr.rel (%p178) target = $region32
      $region31: #{tpu_custom_call.1} parent=5 // pred_region
        // Predicated region
        $region33: #{tpu_custom_call.1} parent=31 // pred_check
          %p181 = pneg %p34
        $region34: #{tpu_custom_call.1} parent=31 // pred_check_branch
          %183 = sbr.rel (%p181) target = $region36
        $region35: #{tpu_custom_call.1} parent=31 // pred_region
          %s184 = smul.u32 4, %s14
          %p185 = scmp.lt.s32.totalorder %s184, 7
          %s186 = scalar_select %p185, %s184, 7
          %s187 = smul.addr %s186, 8
          %s188 = scalar_lea.vmem %s0, %s187
          %s189 = smul.u32 4, %s14
        $region36: #{tpu_custom_call.1} parent=31 // pred_fallthru
          _
      $region32: #{tpu_custom_call.1} parent=5 // pred_fallthru
        _
      %p190 = scmp.le.s32.totalorder 1, %s14
      %p191 = scmp.lt.s32.totalorder %s14, 3
      %p192 = pnand %p190, %p191
      %p193 = pneg %p192
      // Predicated region
      $region37: #{tpu_custom_call.1} parent=5 // pred_check
        _
      $region38: #{tpu_custom_call.1} parent=5 // pred_check_branch
        %195 = sbr.rel (%p192) target = $region40
      $region39: #{tpu_custom_call.1} parent=5 // pred_region
        %s196 = ssub.s32 %s14, 1
        %s197 = smul.u32 4, %s19
        %p198 = scmp.lt.s32.totalorder %s197, 7
        %s199 = scalar_select %p198, %s197, 7
        %s200 = smul.addr %s199, 8
        %s201 = scalar_lea.vmem %s0, %s200
        %p202 = pneg %p40
        %p203 = pneg %p37
        %p204 = pneg %p61
        %p205 = pneg %p58
        %p206 = pneg %p82
        %p207 = pneg %p79
        %p208 = pneg %p103
        %p209 = pneg %p100
        %p210 = pneg %p124
        %p211 = pneg %p121
        %p212 = pneg %p150
        %p213 = pneg %p147
        %s214 = sand.u32 %s137, 1
        %s215 = scalar_lea.sflag [#allocation3], %s214
        %s216 = sand.u32 %s137, 1
        %s217 = smul.addr %s216, 32
        %s218 = scalar_lea.vmem [#allocation2], %s217
        %s219 = smul.u32 4, %s19
        %p220 = scmp.lt.s32.totalorder %s219, 7
        %s221 = scalar_select %p220, %s219, 7
        %s222 = smul.addr %s221, 8
        %s223 = scalar_lea.vmem %s0, %s222
        %s224 = smul.u32 4, %s19
        %s225 = smul.u32 4, %s19
        %v226 = vld [vmem:[%s223] sm:$0xff]
        %v227 = vld [vmem:[%s223 + $0x8] sm:$0xff]
        %v228 = vld [vmem:[%s223 + $0x10] sm:$0xff]
        %v229 = vld [vmem:[%s223 + $0x18] sm:$0xff]
        %v230 = vld [vmem:[%s1] sm:$0xff]
        %v231 = vld [vmem:[%s1 + $0x8] sm:$0xff]
        %v232 = vld [vmem:[%s2] sm:$0x1]
        %v234 = vlaneseq
        %v235 = vshrl.u32 %v234, 7
        %v236 = vsub.s32 0, %v235
        %v237 = vrot.slane %v232, %v236
        %vm239 = vcmask 130048
        %v241 = vsel %vm239, %v226, 0
        %v244 = vsel %vm239, %v227, 0
        %v247 = vsel %vm239, %v228, 0
        %v250 = vsel %vm239, %v229, 0
        %252 = vmatprep.subr.mxu0 0.0
        %v253 = vand.u32 %v230, 4294901760
        %254 = vmatpush1.msra.mxu0 %v253
        %255 = vmatprep.subr.mxu0 0.0
        %v256 = vand.u32 %v231, 4294901760
        %257 = vmatpush1.msra.mxu0 %v256
        %258 = vmatprep.subr.mxu0 0.0
        %259 = vmatpush1.msra.mxu0 0.0
        %260 = vmatprep.subr.mxu0 0.0
        %261 = vmatpush1.msra.mxu0 0.0
        %262 = vmatprep.subr.mxu0 0.0
        %263 = vmatpush1.msra.mxu0 0.0
        %264 = vmatprep.subr.mxu0 0.0
        %265 = vmatpush1.msra.mxu0 0.0
        %266 = vmatprep.subr.mxu0 0.0
        %267 = vmatpush1.msra.mxu0 0.0
        %268 = vmatprep.subr.mxu0 0.0
        %269 = vmatpush1.msra.mxu0 0.0
        %270 = vmatprep.subr.mxu0 0.0
        %271 = vmatpush1.msra.mxu0 0.0
        %272 = vmatprep.subr.mxu0 0.0
        %273 = vmatpush1.msra.mxu0 0.0
        %274 = vmatprep.subr.mxu0 0.0
        %275 = vmatpush1.msra.mxu0 0.0
        %276 = vmatprep.subr.mxu0 0.0
        %277 = vmatpush1.msra.mxu0 0.0
        %278 = vmatprep.subr.mxu0 0.0
        %279 = vmatpush1.msra.mxu0 0.0
        %280 = vmatprep.subr.mxu0 0.0
        %281 = vmatpush1.msra.mxu0 0.0
        %282 = vmatprep.subr.mxu0 0.0
        %283 = vmatpush1.msra.mxu0 0.0
        %284 = vmatprep.subr.mxu0 0.0
        %285 = vmatpush1.msra.mxu0 0.0
        %286 = vmatprep.subr.mxu0 0.0
        %287 = vmatpush1.msra.mxu0 0.0
        %288 = vmatprep.subr.mxu0 0.0
        %289 = vmatpush1.msra.mxu0 0.0
        %290 = vmatprep.subr.mxu0 0.0
        %291 = vmatpush1.msra.mxu0 0.0
        %292 = vmatprep.subr.mxu0 0.0
        %293 = vmatpush1.msra.mxu0 0.0
        %294 = vmatprep.subr.mxu0 0.0
        %295 = vmatpush1.msra.mxu0 0.0
        %296 = vmatprep.subr.mxu0 0.0
        %297 = vmatpush1.msra.mxu0 0.0
        %298 = vmatprep.subr.mxu0 0.0
        %299 = vmatpush1.msra.mxu0 0.0
        %300 = vmatprep.subr.mxu0 0.0
        %301 = vmatpush1.msra.mxu0 0.0
        %302 = vmatprep.subr.mxu0 0.0
        %303 = vmatpush1.msra.mxu0 0.0
        %304 = vmatprep.subr.mxu0 0.0
        %305 = vmatpush1.msra.mxu0 0.0
        %306 = vmatprep.subr.mxu0 0.0
        %307 = vmatpush1.msra.mxu0 0.0
        %308 = vmatprep.subr.mxu0 0.0
        %309 = vmatpush1.msra.mxu0 0.0
        %310 = vmatprep.subr.mxu0 0.0
        %311 = vmatpush1.msra.mxu0 0.0
        %312 = vmatprep.subr.mxu0 0.0
        %313 = vmatpush1.msra.mxu0 0.0
        %314 = vmatprep.subr.mxu0 0.0
        %315 = vmatpush1.msra.mxu0 0.0
        %316 = vmatprep.subr.mxu0 0.0
        %317 = vmatpush1.msra.mxu0 0.0
        %318 = vmatprep.mubr.f32.mxu0 0.0
        %v319 = vand.u32 %v241, 4294901760
        %v320 = vsub.f32 %v241, %v319
        %v321 = vand.u32 %v320, 4294901760
        %v322 = vsub.f32 %v320, %v321
        %v323 = vand.u32 %v322, 4294901760
        %324 = vmatmul.mubr.f32.gmra.mrb[0].mxu0 %v323
        %v325 = vpop.f32.mrb[0].mxu0
        %v326 = vadd.f32 %v237, %v325
        %v327 = vpop.f32.mrb[0].mxu0
        %328 = vmatprep.mubr.f32.mxu0 0.0
        %v329 = vand.u32 %v244, 4294901760
        %v330 = vsub.f32 %v244, %v329
        %v331 = vand.u32 %v330, 4294901760
        %v332 = vsub.f32 %v330, %v331
        %v333 = vand.u32 %v332, 4294901760
        %334 = vmatmul.mubr.f32.gmra.mrb[0].mxu0 %v333
        %v335 = vpop.f32.mrb[0].mxu0
        %v336 = vadd.f32 %v237, %v335
        %v337 = vpop.f32.mrb[0].mxu0
        %338 = vmatprep.mubr.f32.mxu0 0.0
        %v339 = vand.u32 %v247, 4294901760
        %v340 = vsub.f32 %v247, %v339
        %v341 = vand.u32 %v340, 4294901760
        %v342 = vsub.f32 %v340, %v341
        %v343 = vand.u32 %v342, 4294901760
        %344 = vmatmul.mubr.f32.gmra.mrb[0].mxu0 %v343
        %v345 = vpop.f32.mrb[0].mxu0
        %v346 = vadd.f32 %v237, %v345
        %v347 = vpop.f32.mrb[0].mxu0
        %348 = vmatprep.mubr.f32.mxu0 0.0
        %v349 = vand.u32 %v250, 4294901760
        %v350 = vsub.f32 %v250, %v349
        %v351 = vand.u32 %v350, 4294901760
        %v352 = vsub.f32 %v350, %v351
        %v353 = vand.u32 %v352, 4294901760
        %354 = vmatmul.mubr.f32.gmra.mrb[0].mxu0 %v353
        %v355 = vpop.f32.mrb[0].mxu0
        %v356 = vadd.f32 %v237, %v355
        %v357 = vpop.f32.mrb[0].mxu0
        %358 = vdwg.mxu0
        %359 = vmatprep.subr.mxu0 0.0
        %v360 = vand.u32 %v230, 4294901760
        %v361 = vsub.f32 %v230, %v360
        %v362 = vand.u32 %v361, 4294901760
        %v363 = vsub.f32 %v361, %v362
        %v364 = vand.u32 %v363, 4294901760
        %365 = vmatpush1.msra.mxu0 %v364
        %366 = vmatprep.subr.mxu0 0.0
        %v367 = vand.u32 %v231, 4294901760
        %v368 = vsub.f32 %v231, %v367
        %v369 = vand.u32 %v368, 4294901760
        %v370 = vsub.f32 %v368, %v369
        %v371 = vand.u32 %v370, 4294901760
        %372 = vmatpush1.msra.mxu0 %v371
        %373 = vmatprep.subr.mxu0 0.0
        %374 = vmatpush1.msra.mxu0 0.0
        %375 = vmatprep.subr.mxu0 0.0
        %376 = vmatpush1.msra.mxu0 0.0
        %377 = vmatprep.subr.mxu0 0.0
        %378 = vmatpush1.msra.mxu0 0.0
        %379 = vmatprep.subr.mxu0 0.0
        %380 = vmatpush1.msra.mxu0 0.0
        %381 = vmatprep.subr.mxu0 0.0
        %382 = vmatpush1.msra.mxu0 0.0
        %383 = vmatprep.subr.mxu0 0.0
        %384 = vmatpush1.msra.mxu0 0.0
        %385 = vmatprep.subr.mxu0 0.0
        %386 = vmatpush1.msra.mxu0 0.0
        %387 = vmatprep.subr.mxu0 0.0
        %388 = vmatpush1.msra.mxu0 0.0
        %389 = vmatprep.subr.mxu0 0.0
        %390 = vmatpush1.msra.mxu0 0.0
        %391 = vmatprep.subr.mxu0 0.0
        %392 = vmatpush1.msra.mxu0 0.0
        %393 = vmatprep.subr.mxu0 0.0
        %394 = vmatpush1.msra.mxu0 0.0
        %395 = vmatprep.subr.mxu0 0.0
        %396 = vmatpush1.msra.mxu0 0.0
        %397 = vmatprep.subr.mxu0 0.0
        %398 = vmatpush1.msra.mxu0 0.0
        %399 = vmatprep.subr.mxu0 0.0
        %400 = vmatpush1.msra.mxu0 0.0
        %401 = vmatprep.subr.mxu0 0.0
        %402 = vmatpush1.msra.mxu0 0.0
        %403 = vmatprep.subr.mxu0 0.0
        %404 = vmatpush1.msra.mxu0 0.0
        %405 = vmatprep.subr.mxu0 0.0
        %406 = vmatpush1.msra.mxu0 0.0
        %407 = vmatprep.subr.mxu0 0.0
        %408 = vmatpush1.msra.mxu0 0.0
        %409 = vmatprep.subr.mxu0 0.0
        %410 = vmatpush1.msra.mxu0 0.0
        %411 = vmatprep.subr.mxu0 0.0
        %412 = vmatpush1.msra.mxu0 0.0
        %413 = vmatprep.subr.mxu0 0.0
        %414 = vmatpush1.msra.mxu0 0.0
        %415 = vmatprep.subr.mxu0 0.0
        %416 = vmatpush1.msra.mxu0 0.0
        %417 = vmatprep.subr.mxu0 0.0
        %418 = vmatpush1.msra.mxu0 0.0
        %419 = vmatprep.subr.mxu0 0.0
        %420 = vmatpush1.msra.mxu0 0.0
        %421 = vmatprep.subr.mxu0 0.0
        %422 = vmatpush1.msra.mxu0 0.0
        %423 = vmatprep.subr.mxu0 0.0
        %424 = vmatpush1.msra.mxu0 0.0
        %425 = vmatprep.subr.mxu0 0.0
        %426 = vmatpush1.msra.mxu0 0.0
        %427 = vmatprep.subr.mxu0 0.0
        %428 = vmatpush1.msra.mxu0 0.0
        %429 = vmatprep.subr.mxu0 0.0
        %430 = vmatpush1.msra.mxu0 0.0
        %431 = vmatprep.subr.mxu0 0.0
        %432 = vmatpush1.msra.mxu0 0.0
        %433 = vmatprep.mubr.f32.mxu0 0.0
        %v434 = vand.u32 %v241, 4294901760
        %435 = vmatmul.mubr.f32.gmra.mrb[0].mxu0 %v434
        %v436 = vpop.f32.mrb[0].mxu0
        %v437 = vadd.f32 %v326, %v436
        %v438 = vpop.f32.mrb[0].mxu0
        %439 = vmatprep.mubr.f32.mxu0 0.0
        %v440 = vand.u32 %v244, 4294901760
        %441 = vmatmul.mubr.f32.gmra.mrb[0].mxu0 %v440
        %v442 = vpop.f32.mrb[0].mxu0
        %v443 = vadd.f32 %v336, %v442
        %v444 = vpop.f32.mrb[0].mxu0
        %445 = vmatprep.mubr.f32.mxu0 0.0
        %v446 = vand.u32 %v247, 4294901760
        %447 = vmatmul.mubr.f32.gmra.mrb[0].mxu0 %v446
        %v448 = vpop.f32.mrb[0].mxu0
        %v449 = vadd.f32 %v346, %v448
        %v450 = vpop.f32.mrb[0].mxu0
        %451 = vmatprep.mubr.f32.mxu0 0.0
        %v452 = vand.u32 %v250, 4294901760
        %453 = vmatmul.mubr.f32.gmra.mrb[0].mxu0 %v452
        %v454 = vpop.f32.mrb[0].mxu0
        %v455 = vadd.f32 %v356, %v454
        %v456 = vpop.f32.mrb[0].mxu0
        %457 = vdwg.mxu0
        %458 = vmatprep.subr.mxu0 0.0
        %v459 = vand.u32 %v230, 4294901760
        %v460 = vsub.f32 %v230, %v459
        %461 = vmatpush1.msra.mxu0 %v460
        %462 = vmatprep.subr.mxu0 0.0
        %v463 = vand.u32 %v231, 4294901760
        %v464 = vsub.f32 %v231, %v463
        %465 = vmatpush1.msra.mxu0 %v464
        %466 = vmatprep.subr.mxu0 0.0
        %467 = vmatpush1.msra.mxu0 0.0
        %468 = vmatprep.subr.mxu0 0.0
        %469 = vmatpush1.msra.mxu0 0.0
        %470 = vmatprep.subr.mxu0 0.0
        %471 = vmatpush1.msra.mxu0 0.0
        %472 = vmatprep.subr.mxu0 0.0
        %473 = vmatpush1.msra.mxu0 0.0
        %474 = vmatprep.subr.mxu0 0.0
        %475 = vmatpush1.msra.mxu0 0.0
        %476 = vmatprep.subr.mxu0 0.0
        %477 = vmatpush1.msra.mxu0 0.0
        %478 = vmatprep.subr.mxu0 0.0
        %479 = vmatpush1.msra.mxu0 0.0
        %480 = vmatprep.subr.mxu0 0.0
        %481 = vmatpush1.msra.mxu0 0.0
        %482 = vmatprep.subr.mxu0 0.0
        %483 = vmatpush1.msra.mxu0 0.0
        %484 = vmatprep.subr.mxu0 0.0
        %485 = vmatpush1.msra.mxu0 0.0
        %486 = vmatprep.subr.mxu0 0.0
        %487 = vmatpush1.msra.mxu0 0.0
        %488 = vmatprep.subr.mxu0 0.0
        %489 = vmatpush1.msra.mxu0 0.0
        %490 = vmatprep.subr.mxu0 0.0
        %491 = vmatpush1.msra.mxu0 0.0
        %492 = vmatprep.subr.mxu0 0.0
        %493 = vmatpush1.msra.mxu0 0.0
        %494 = vmatprep.subr.mxu0 0.0
        %495 = vmatpush1.msra.mxu0 0.0
        %496 = vmatprep.subr.mxu0 0.0
        %497 = vmatpush1.msra.mxu0 0.0
        %498 = vmatprep.subr.mxu0 0.0
        %499 = vmatpush1.msra.mxu0 0.0
        %500 = vmatprep.subr.mxu0 0.0
        %501 = vmatpush1.msra.mxu0 0.0
        %502 = vmatprep.subr.mxu0 0.0
        %503 = vmatpush1.msra.mxu0 0.0
        %504 = vmatprep.subr.mxu0 0.0
        %505 = vmatpush1.msra.mxu0 0.0
        %506 = vmatprep.subr.mxu0 0.0
        %507 = vmatpush1.msra.mxu0 0.0
        %508 = vmatprep.subr.mxu0 0.0
        %509 = vmatpush1.msra.mxu0 0.0
        %510 = vmatprep.subr.mxu0 0.0
        %511 = vmatpush1.msra.mxu0 0.0
        %512 = vmatprep.subr.mxu0 0.0
        %513 = vmatpush1.msra.mxu0 0.0
        %514 = vmatprep.subr.mxu0 0.0
        %515 = vmatpush1.msra.mxu0 0.0
        %516 = vmatprep.subr.mxu0 0.0
        %517 = vmatpush1.msra.mxu0 0.0
        %518 = vmatprep.subr.mxu0 0.0
        %519 = vmatpush1.msra.mxu0 0.0
        %520 = vmatprep.subr.mxu0 0.0
        %521 = vmatpush1.msra.mxu0 0.0
        %522 = vmatprep.subr.mxu0 0.0
        %523 = vmatpush1.msra.mxu0 0.0
        %524 = vmatprep.subr.mxu0 0.0
        %525 = vmatpush1.msra.mxu0 0.0
        %526 = vmatprep.mubr.f32.mxu0 0.0
        %v527 = vand.u32 %v241, 4294901760
        %v528 = vsub.f32 %v241, %v527
        %529 = vmatmul.mubr.f32.gmra.mrb[0].mxu0 %v528
        %v530 = vpop.f32.mrb[0].mxu0
        %v531 = vadd.f32 %v437, %v530
        %v532 = vpop.f32.mrb[0].mxu0
        %533 = vmatprep.mubr.f32.mxu0 0.0
        %v534 = vand.u32 %v244, 4294901760
        %v535 = vsub.f32 %v244, %v534
        %536 = vmatmul.mubr.f32.gmra.mrb[0].mxu0 %v535
        %v537 = vpop.f32.mrb[0].mxu0
        %v538 = vadd.f32 %v443, %v537
        %v539 = vpop.f32.mrb[0].mxu0
        %540 = vmatprep.mubr.f32.mxu0 0.0
        %v541 = vand.u32 %v247, 4294901760
        %v542 = vsub.f32 %v247, %v541
        %543 = vmatmul.mubr.f32.gmra.mrb[0].mxu0 %v542
        %v544 = vpop.f32.mrb[0].mxu0
        %v545 = vadd.f32 %v449, %v544
        %v546 = vpop.f32.mrb[0].mxu0
        %547 = vmatprep.mubr.f32.mxu0 0.0
        %v548 = vand.u32 %v250, 4294901760
        %v549 = vsub.f32 %v250, %v548
        %550 = vmatmul.mubr.f32.gmra.mrb[0].mxu0 %v549
        %v551 = vpop.f32.mrb[0].mxu0
        %v552 = vadd.f32 %v455, %v551
        %v553 = vpop.f32.mrb[0].mxu0
        %554 = vdwg.mxu0
        %555 = vmatprep.subr.mxu0 0.0
        %v556 = vand.u32 %v230, 4294901760
        %557 = vmatpush1.msra.mxu0 %v556
        %558 = vmatprep.subr.mxu0 0.0
        %v559 = vand.u32 %v231, 4294901760
        %560 = vmatpush1.msra.mxu0 %v559
        %561 = vmatprep.subr.mxu0 0.0
        %562 = vmatpush1.msra.mxu0 0.0
        %563 = vmatprep.subr.mxu0 0.0
        %564 = vmatpush1.msra.mxu0 0.0
        %565 = vmatprep.subr.mxu0 0.0
        %566 = vmatpush1.msra.mxu0 0.0
        %567 = vmatprep.subr.mxu0 0.0
        %568 = vmatpush1.msra.mxu0 0.0
        %569 = vmatprep.subr.mxu0 0.0
        %570 = vmatpush1.msra.mxu0 0.0
        %571 = vmatprep.subr.mxu0 0.0
        %572 = vmatpush1.msra.mxu0 0.0
        %573 = vmatprep.subr.mxu0 0.0
        %574 = vmatpush1.msra.mxu0 0.0
        %575 = vmatprep.subr.mxu0 0.0
        %576 = vmatpush1.msra.mxu0 0.0
        %577 = vmatprep.subr.mxu0 0.0
        %578 = vmatpush1.msra.mxu0 0.0
        %579 = vmatprep.subr.mxu0 0.0
        %580 = vmatpush1.msra.mxu0 0.0
        %581 = vmatprep.subr.mxu0 0.0
        %582 = vmatpush1.msra.mxu0 0.0
        %583 = vmatprep.subr.mxu0 0.0
        %584 = vmatpush1.msra.mxu0 0.0
        %585 = vmatprep.subr.mxu0 0.0
        %586 = vmatpush1.msra.mxu0 0.0
        %587 = vmatprep.subr.mxu0 0.0
        %588 = vmatpush1.msra.mxu0 0.0
        %589 = vmatprep.subr.mxu0 0.0
        %590 = vmatpush1.msra.mxu0 0.0
        %591 = vmatprep.subr.mxu0 0.0
        %592 = vmatpush1.msra.mxu0 0.0
        %593 = vmatprep.subr.mxu0 0.0
        %594 = vmatpush1.msra.mxu0 0.0
        %595 = vmatprep.subr.mxu0 0.0
        %596 = vmatpush1.msra.mxu0 0.0
        %597 = vmatprep.subr.mxu0 0.0
        %598 = vmatpush1.msra.mxu0 0.0
        %599 = vmatprep.subr.mxu0 0.0
        %600 = vmatpush1.msra.mxu0 0.0
        %601 = vmatprep.subr.mxu0 0.0
        %602 = vmatpush1.msra.mxu0 0.0
        %603 = vmatprep.subr.mxu0 0.0
        %604 = vmatpush1.msra.mxu0 0.0
        %605 = vmatprep.subr.mxu0 0.0
        %606 = vmatpush1.msra.mxu0 0.0
        %607 = vmatprep.subr.mxu0 0.0
        %608 = vmatpush1.msra.mxu0 0.0
        %609 = vmatprep.subr.mxu0 0.0
        %610 = vmatpush1.msra.mxu0 0.0
        %611 = vmatprep.subr.mxu0 0.0
        %612 = vmatpush1.msra.mxu0 0.0
        %613 = vmatprep.subr.mxu0 0.0
        %614 = vmatpush1.msra.mxu0 0.0
        %615 = vmatprep.subr.mxu0 0.0
        %616 = vmatpush1.msra.mxu0 0.0
        %617 = vmatprep.subr.mxu0 0.0
        %618 = vmatpush1.msra.mxu0 0.0
        %619 = vmatprep.subr.mxu0 0.0
        %620 = vmatpush1.msra.mxu0 0.0
        %621 = vmatprep.mubr.f32.mxu0 0.0
        %v622 = vand.u32 %v241, 4294901760
        %v623 = vsub.f32 %v241, %v622
        %v624 = vand.u32 %v623, 4294901760
        %625 = vmatmul.mubr.f32.gmra.mrb[0].mxu0 %v624
        %v626 = vpop.f32.mrb[0].mxu0
        %v627 = vadd.f32 %v531, %v626
        %v628 = vpop.f32.mrb[0].mxu0
        %629 = vmatprep.mubr.f32.mxu0 0.0
        %v630 = vand.u32 %v244, 4294901760
        %v631 = vsub.f32 %v244, %v630
        %v632 = vand.u32 %v631, 4294901760
        %633 = vmatmul.mubr.f32.gmra.mrb[0].mxu0 %v632
        %v634 = vpop.f32.mrb[0].mxu0
        %v635 = vadd.f32 %v538, %v634
        %v636 = vpop.f32.mrb[0].mxu0
        %637 = vmatprep.mubr.f32.mxu0 0.0
        %v638 = vand.u32 %v247, 4294901760
        %v639 = vsub.f32 %v247, %v638
        %v640 = vand.u32 %v639, 4294901760
        %641 = vmatmul.mubr.f32.gmra.mrb[0].mxu0 %v640
        %v642 = vpop.f32.mrb[0].mxu0
        %v643 = vadd.f32 %v545, %v642
        %v644 = vpop.f32.mrb[0].mxu0
        %645 = vmatprep.mubr.f32.mxu0 0.0
        %v646 = vand.u32 %v250, 4294901760
        %v647 = vsub.f32 %v250, %v646
        %v648 = vand.u32 %v647, 4294901760
        %649 = vmatmul.mubr.f32.gmra.mrb[0].mxu0 %v648
        %v650 = vpop.f32.mrb[0].mxu0
        %v651 = vadd.f32 %v552, %v650
        %v652 = vpop.f32.mrb[0].mxu0
        %653 = vdwg.mxu0
        %654 = vmatprep.subr.mxu0 0.0
        %v655 = vand.u32 %v230, 4294901760
        %v656 = vsub.f32 %v230, %v655
        %v657 = vand.u32 %v656, 4294901760
        %658 = vmatpush1.msra.mxu0 %v657
        %659 = vmatprep.subr.mxu0 0.0
        %v660 = vand.u32 %v231, 4294901760
        %v661 = vsub.f32 %v231, %v660
        %v662 = vand.u32 %v661, 4294901760
        %663 = vmatpush1.msra.mxu0 %v662
        %664 = vmatprep.subr.mxu0 0.0
        %665 = vmatpush1.msra.mxu0 0.0
        %666 = vmatprep.subr.mxu0 0.0
        %667 = vmatpush1.msra.mxu0 0.0
        %668 = vmatprep.subr.mxu0 0.0
        %669 = vmatpush1.msra.mxu0 0.0
        %670 = vmatprep.subr.mxu0 0.0
        %671 = vmatpush1.msra.mxu0 0.0
        %672 = vmatprep.subr.mxu0 0.0
        %673 = vmatpush1.msra.mxu0 0.0
        %674 = vmatprep.subr.mxu0 0.0
        %675 = vmatpush1.msra.mxu0 0.0
        %676 = vmatprep.subr.mxu0 0.0
        %677 = vmatpush1.msra.mxu0 0.0
        %678 = vmatprep.subr.mxu0 0.0
        %679 = vmatpush1.msra.mxu0 0.0
        %680 = vmatprep.subr.mxu0 0.0
        %681 = vmatpush1.msra.mxu0 0.0
        %682 = vmatprep.subr.mxu0 0.0
        %683 = vmatpush1.msra.mxu0 0.0
        %684 = vmatprep.subr.mxu0 0.0
        %685 = vmatpush1.msra.mxu0 0.0
        %686 = vmatprep.subr.mxu0 0.0
        %687 = vmatpush1.msra.mxu0 0.0
        %688 = vmatprep.subr.mxu0 0.0
        %689 = vmatpush1.msra.mxu0 0.0
        %690 = vmatprep.subr.mxu0 0.0
        %691 = vmatpush1.msra.mxu0 0.0
        %692 = vmatprep.subr.mxu0 0.0
        %693 = vmatpush1.msra.mxu0 0.0
        %694 = vmatprep.subr.mxu0 0.0
        %695 = vmatpush1.msra.mxu0 0.0
        %696 = vmatprep.subr.mxu0 0.0
        %697 = vmatpush1.msra.mxu0 0.0
        %698 = vmatprep.subr.mxu0 0.0
        %699 = vmatpush1.msra.mxu0 0.0
        %700 = vmatprep.subr.mxu0 0.0
        %701 = vmatpush1.msra.mxu0 0.0
        %702 = vmatprep.subr.mxu0 0.0
        %703 = vmatpush1.msra.mxu0 0.0
        %704 = vmatprep.subr.mxu0 0.0
        %705 = vmatpush1.msra.mxu0 0.0
        %706 = vmatprep.subr.mxu0 0.0
        %707 = vmatpush1.msra.mxu0 0.0
        %708 = vmatprep.subr.mxu0 0.0
        %709 = vmatpush1.msra.mxu0 0.0
        %710 = vmatprep.subr.mxu0 0.0
        %711 = vmatpush1.msra.mxu0 0.0
        %712 = vmatprep.subr.mxu0 0.0
        %713 = vmatpush1.msra.mxu0 0.0
        %714 = vmatprep.subr.mxu0 0.0
        %715 = vmatpush1.msra.mxu0 0.0
        %716 = vmatprep.subr.mxu0 0.0
        %717 = vmatpush1.msra.mxu0 0.0
        %718 = vmatprep.subr.mxu0 0.0
        %719 = vmatpush1.msra.mxu0 0.0
        %720 = vmatprep.subr.mxu0 0.0
        %721 = vmatpush1.msra.mxu0 0.0
        %722 = vmatprep.subr.mxu0 0.0
        %723 = vmatpush1.msra.mxu0 0.0
        %724 = vmatprep.mubr.f32.mxu0 0.0
        %v725 = vand.u32 %v241, 4294901760
        %726 = vmatmul.mubr.f32.gmra.mrb[0].mxu0 %v725
        %v727 = vpop.f32.mrb[0].mxu0
        %v728 = vadd.f32 %v627, %v727
        %v729 = vpop.f32.mrb[0].mxu0
        %730 = vmatprep.mubr.f32.mxu0 0.0
        %v731 = vand.u32 %v244, 4294901760
        %732 = vmatmul.mubr.f32.gmra.mrb[0].mxu0 %v731
        %v733 = vpop.f32.mrb[0].mxu0
        %v734 = vadd.f32 %v635, %v733
        %v735 = vpop.f32.mrb[0].mxu0
        %736 = vmatprep.mubr.f32.mxu0 0.0
        %v737 = vand.u32 %v247, 4294901760
        %738 = vmatmul.mubr.f32.gmra.mrb[0].mxu0 %v737
        %v739 = vpop.f32.mrb[0].mxu0
        %v740 = vadd.f32 %v643, %v739
        %v741 = vpop.f32.mrb[0].mxu0
        %742 = vmatprep.mubr.f32.mxu0 0.0
        %v743 = vand.u32 %v250, 4294901760
        %744 = vmatmul.mubr.f32.gmra.mrb[0].mxu0 %v743
        %v745 = vpop.f32.mrb[0].mxu0
        %v746 = vadd.f32 %v651, %v745
        %v747 = vpop.f32.mrb[0].mxu0
        %748 = vdwg.mxu0
        %749 = vmatprep.subr.mxu0 0.0
        %v750 = vand.u32 %v230, 4294901760
        %751 = vmatpush1.msra.mxu0 %v750
        %752 = vmatprep.subr.mxu0 0.0
        %v753 = vand.u32 %v231, 4294901760
        %754 = vmatpush1.msra.mxu0 %v753
        %755 = vmatprep.subr.mxu0 0.0
        %756 = vmatpush1.msra.mxu0 0.0
        %757 = vmatprep.subr.mxu0 0.0
        %758 = vmatpush1.msra.mxu0 0.0
        %759 = vmatprep.subr.mxu0 0.0
        %760 = vmatpush1.msra.mxu0 0.0
        %761 = vmatprep.subr.mxu0 0.0
        %762 = vmatpush1.msra.mxu0 0.0
        %763 = vmatprep.subr.mxu0 0.0
        %764 = vmatpush1.msra.mxu0 0.0
        %765 = vmatprep.subr.mxu0 0.0
        %766 = vmatpush1.msra.mxu0 0.0
        %767 = vmatprep.subr.mxu0 0.0
        %768 = vmatpush1.msra.mxu0 0.0
        %769 = vmatprep.subr.mxu0 0.0
        %770 = vmatpush1.msra.mxu0 0.0
        %771 = vmatprep.subr.mxu0 0.0
        %772 = vmatpush1.msra.mxu0 0.0
        %773 = vmatprep.subr.mxu0 0.0
        %774 = vmatpush1.msra.mxu0 0.0
        %775 = vmatprep.subr.mxu0 0.0
        %776 = vmatpush1.msra.mxu0 0.0
        %777 = vmatprep.subr.mxu0 0.0
        %778 = vmatpush1.msra.mxu0 0.0
        %779 = vmatprep.subr.mxu0 0.0
        %780 = vmatpush1.msra.mxu0 0.0
        %781 = vmatprep.subr.mxu0 0.0
        %782 = vmatpush1.msra.mxu0 0.0
        %783 = vmatprep.subr.mxu0 0.0
        %784 = vmatpush1.msra.mxu0 0.0
        %785 = vmatprep.subr.mxu0 0.0
        %786 = vmatpush1.msra.mxu0 0.0
        %787 = vmatprep.subr.mxu0 0.0
        %788 = vmatpush1.msra.mxu0 0.0
        %789 = vmatprep.subr.mxu0 0.0
        %790 = vmatpush1.msra.mxu0 0.0
        %791 = vmatprep.subr.mxu0 0.0
        %792 = vmatpush1.msra.mxu0 0.0
        %793 = vmatprep.subr.mxu0 0.0
        %794 = vmatpush1.msra.mxu0 0.0
        %795 = vmatprep.subr.mxu0 0.0
        %796 = vmatpush1.msra.mxu0 0.0
        %797 = vmatprep.subr.mxu0 0.0
        %798 = vmatpush1.msra.mxu0 0.0
        %799 = vmatprep.subr.mxu0 0.0
        %800 = vmatpush1.msra.mxu0 0.0
        %801 = vmatprep.subr.mxu0 0.0
        %802 = vmatpush1.msra.mxu0 0.0
        %803 = vmatprep.subr.mxu0 0.0
        %804 = vmatpush1.msra.mxu0 0.0
        %805 = vmatprep.subr.mxu0 0.0
        %806 = vmatpush1.msra.mxu0 0.0
        %807 = vmatprep.subr.mxu0 0.0
        %808 = vmatpush1.msra.mxu0 0.0
        %809 = vmatprep.subr.mxu0 0.0
        %810 = vmatpush1.msra.mxu0 0.0
        %811 = vmatprep.subr.mxu0 0.0
        %812 = vmatpush1.msra.mxu0 0.0
        %813 = vmatprep.subr.mxu0 0.0
        %814 = vmatpush1.msra.mxu0 0.0
        %815 = vmatprep.mubr.f32.mxu0 0.0
        %v816 = vand.u32 %v241, 4294901760
        %817 = vmatmul.mubr.f32.gmra.mrb[0].mxu0 %v816
        %v818 = vpop.f32.mrb[0].mxu0
        %v819 = vadd.f32 %v728, %v818
        %v820 = vpop.f32.mrb[0].mxu0
        %821 = vmatprep.mubr.f32.mxu0 0.0
        %v822 = vand.u32 %v244, 4294901760
        %823 = vmatmul.mubr.f32.gmra.mrb[0].mxu0 %v822
        %v824 = vpop.f32.mrb[0].mxu0
        %v825 = vadd.f32 %v734, %v824
        %v826 = vpop.f32.mrb[0].mxu0
        %827 = vmatprep.mubr.f32.mxu0 0.0
        %v828 = vand.u32 %v247, 4294901760
        %829 = vmatmul.mubr.f32.gmra.mrb[0].mxu0 %v828
        %v830 = vpop.f32.mrb[0].mxu0
        %v831 = vadd.f32 %v740, %v830
        %v832 = vpop.f32.mrb[0].mxu0
        %833 = vmatprep.mubr.f32.mxu0 0.0
        %v834 = vand.u32 %v250, 4294901760
        %835 = vmatmul.mubr.f32.gmra.mrb[0].mxu0 %v834
        %v836 = vpop.f32.mrb[0].mxu0
        %v837 = vadd.f32 %v746, %v836
        %v838 = vpop.f32.mrb[0].mxu0
        %839 = vdwg.mxu0
        %v840 = vmul.f32 %v819, 0.5
        %v841 = vmul.f32 %v825, 0.5
        %v842 = vmul.f32 %v831, 0.5
        %v843 = vmul.f32 %v837, 0.5
        %v844 = vmul.f32 %v819, 0.70710677
        %v845 = vmul.f32 %v825, 0.70710677
        %v846 = vmul.f32 %v831, 0.70710677
        %v847 = vmul.f32 %v837, 0.70710677
        %v848 = verf.f32.pop %v844
        %v849 = verf.f32.pop %v845
        %v850 = verf.f32.pop %v846
        %v851 = verf.f32.pop %v847
        %v852 = vadd.f32 %v848, 1.0
        %v853 = vadd.f32 %v849, 1.0
        %v854 = vadd.f32 %v850, 1.0
        %v855 = vadd.f32 %v851, 1.0
        %v856 = vmul.f32 %v840, %v852
        %v857 = vmul.f32 %v841, %v853
        %v858 = vmul.f32 %v842, %v854
        %v859 = vmul.f32 %v843, %v855
        %v860 = vld [vmem:[%s3] sm:$0xff]
        %v861 = vld [vmem:[%s3 + $0x8] sm:$0xff]
        %v862 = vld [vmem:[%s3 + $0x10] sm:$0xff]
        %v863 = vld [vmem:[%s3 + $0x18] sm:$0xff]
        %v864 = vld [vmem:[%s3 + $0x20] sm:$0xff]
        %v865 = vld [vmem:[%s3 + $0x28] sm:$0xff]
        %v866 = vld [vmem:[%s3 + $0x30] sm:$0xff]
        %v867 = vld [vmem:[%s3 + $0x38] sm:$0xf]
        %v868 = vld [vmem:[%s4] sm:$0x1]
        %v870 = vlaneseq
        %v871 = vshrl.u32 %v870, 7
        %v872 = vsub.s32 0, %v871
        %v873 = vrot.slane %v868, %v872
        %vm875 = vcmask 490496
        %v877 = vsel %vm875, %v856, 0
        %v880 = vsel %vm875, %v857, 0
        %v883 = vsel %vm875, %v858, 0
        %v886 = vsel %vm875, %v859, 0
        %vm888 = vcmask 1043456
        %v890 = vsel %vm888, %v867, 0
        %892 = vmatprep.subr.mxu0 0.0
        %v893 = vand.u32 %v860, 4294901760
        %894 = vmatpush1.msra.mxu0 %v893
        %895 = vmatprep.subr.mxu0 0.0
        %v896 = vand.u32 %v861, 4294901760
        %897 = vmatpush1.msra.mxu0 %v896
        %898 = vmatprep.subr.mxu0 0.0
        %v899 = vand.u32 %v862, 4294901760
        %900 = vmatpush1.msra.mxu0 %v899
        %901 = vmatprep.subr.mxu0 0.0
        %v902 = vand.u32 %v863, 4294901760
        %903 = vmatpush1.msra.mxu0 %v902
        %904 = vmatprep.subr.mxu0 0.0
        %v905 = vand.u32 %v864, 4294901760
        %906 = vmatpush1.msra.mxu0 %v905
        %907 = vmatprep.subr.mxu0 0.0
        %v908 = vand.u32 %v865, 4294901760
        %909 = vmatpush1.msra.mxu0 %v908
        %910 = vmatprep.subr.mxu0 0.0
        %v911 = vand.u32 %v866, 4294901760
        %912 = vmatpush1.msra.mxu0 %v911
        %913 = vmatprep.subr.mxu0 0.0
        %v914 = vand.u32 %v890, 4294901760
        %915 = vmatpush1.msra.mxu0 %v914
        %916 = vmatprep.subr.mxu0 0.0
        %917 = vmatpush1.msra.mxu0 0.0
        %918 = vmatprep.subr.mxu0 0.0
        %919 = vmatpush1.msra.mxu0 0.0
        %920 = vmatprep.subr.mxu0 0.0
        %921 = vmatpush1.msra.mxu0 0.0
        %922 = vmatprep.subr.mxu0 0.0
        %923 = vmatpush1.msra.mxu0 0.0
        %924 = vmatprep.subr.mxu0 0.0
        %925 = vmatpush1.msra.mxu0 0.0
        %926 = vmatprep.subr.mxu0 0.0
        %927 = vmatpush1.msra.mxu0 0.0
        %928 = vmatprep.subr.mxu0 0.0
        %929 = vmatpush1.msra.mxu0 0.0
        %930 = vmatprep.subr.mxu0 0.0
        %931 = vmatpush1.msra.mxu0 0.0
        %932 = vmatprep.subr.mxu0 0.0
        %933 = vmatpush1.msra.mxu0 0.0
        %934 = vmatprep.subr.mxu0 0.0
        %935 = vmatpush1.msra.mxu0 0.0
        %936 = vmatprep.subr.mxu0 0.0
        %937 = vmatpush1.msra.mxu0 0.0
        %938 = vmatprep.subr.mxu0 0.0
        %939 = vmatpush1.msra.mxu0 0.0
        %940 = vmatprep.subr.mxu0 0.0
        %941 = vmatpush1.msra.mxu0 0.0
        %942 = vmatprep.subr.mxu0 0.0
        %943 = vmatpush1.msra.mxu0 0.0
        %944 = vmatprep.subr.mxu0 0.0
        %945 = vmatpush1.msra.mxu0 0.0
        %946 = vmatprep.subr.mxu0 0.0
        %947 = vmatpush1.msra.mxu0 0.0
        %948 = vmatprep.subr.mxu0 0.0
        %949 = vmatpush1.msra.mxu0 0.0
        %950 = vmatprep.subr.mxu0 0.0
        %951 = vmatpush1.msra.mxu0 0.0
        %952 = vmatprep.subr.mxu0 0.0
        %953 = vmatpush1.msra.mxu0 0.0
        %954 = vmatprep.subr.mxu0 0.0
        %955 = vmatpush1.msra.mxu0 0.0
        %956 = vmatprep.subr.mxu0 0.0
        %957 = vmatpush1.msra.mxu0 0.0
        %958 = vmatprep.subr.mxu0 0.0
        %959 = vmatpush1.msra.mxu0 0.0
        %960 = vmatprep.subr.mxu0 0.0
        %961 = vmatpush1.msra.mxu0 0.0
        %962 = vmatprep.subr.mxu0 0.0
        %963 = vmatpush1.msra.mxu0 0.0
        %964 = vmatprep.mubr.f32.mxu0 0.0
        %v965 = vand.u32 %v877, 4294901760
        %v966 = vsub.f32 %v877, %v965
        %v967 = vand.u32 %v966, 4294901760
        %v968 = vsub.f32 %v966, %v967
        %v969 = vand.u32 %v968, 4294901760
        %970 = vmatmul.mubr.f32.gmra.mrb[0].mxu0 %v969
        %v971 = vpop.f32.mrb[0].mxu0
        %v972 = vadd.f32 %v873, %v971
        %v973 = vpop.f32.mrb[0].mxu0
        %974 = vmatprep.mubr.f32.mxu0 0.0
        %v975 = vand.u32 %v880, 4294901760
        %v976 = vsub.f32 %v880, %v975
        %v977 = vand.u32 %v976, 4294901760
        %v978 = vsub.f32 %v976, %v977
        %v979 = vand.u32 %v978, 4294901760
        %980 = vmatmul.mubr.f32.gmra.mrb[0].mxu0 %v979
        %v981 = vpop.f32.mrb[0].mxu0
        %v982 = vadd.f32 %v873, %v981
        %v983 = vpop.f32.mrb[0].mxu0
        %984 = vmatprep.mubr.f32.mxu0 0.0
        %v985 = vand.u32 %v883, 4294901760
        %v986 = vsub.f32 %v883, %v985
        %v987 = vand.u32 %v986, 4294901760
        %v988 = vsub.f32 %v986, %v987
        %v989 = vand.u32 %v988, 4294901760
        %990 = vmatmul.mubr.f32.gmra.mrb[0].mxu0 %v989
        %v991 = vpop.f32.mrb[0].mxu0
        %v992 = vadd.f32 %v873, %v991
        %v993 = vpop.f32.mrb[0].mxu0
        %994 = vmatprep.mubr.f32.mxu0 0.0
        %v995 = vand.u32 %v886, 4294901760
        %v996 = vsub.f32 %v886, %v995
        %v997 = vand.u32 %v996, 4294901760
        %v998 = vsub.f32 %v996, %v997
        %v999 = vand.u32 %v998, 4294901760
        %1000 = vmatmul.mubr.f32.gmra.mrb[0].mxu0 %v999
        %v1001 = vpop.f32.mrb[0].mxu0
        %v1002 = vadd.f32 %v873, %v1001
        %v1003 = vpop.f32.mrb[0].mxu0
        %1004 = vdwg.mxu0
        %1005 = vmatprep.subr.mxu0 0.0
        %v1006 = vand.u32 %v860, 4294901760
        %v1007 = vsub.f32 %v860, %v1006
        %v1008 = vand.u32 %v1007, 4294901760
        %v1009 = vsub.f32 %v1007, %v1008
        %v1010 = vand.u32 %v1009, 4294901760
        %1011 = vmatpush1.msra.mxu0 %v1010
        %1012 = vmatprep.subr.mxu0 0.0
        %v1013 = vand.u32 %v861, 4294901760
        %v1014 = vsub.f32 %v861, %v1013
        %v1015 = vand.u32 %v1014, 4294901760
        %v1016 = vsub.f32 %v1014, %v1015
        %v1017 = vand.u32 %v1016, 4294901760
        %1018 = vmatpush1.msra.mxu0 %v1017
        %1019 = vmatprep.subr.mxu0 0.0
        %v1020 = vand.u32 %v862, 4294901760
        %v1021 = vsub.f32 %v862, %v1020
        %v1022 = vand.u32 %v1021, 4294901760
        %v1023 = vsub.f32 %v1021, %v1022
        %v1024 = vand.u32 %v1023, 4294901760
        %1025 = vmatpush1.msra.mxu0 %v1024
        %1026 = vmatprep.subr.mxu0 0.0
        %v1027 = vand.u32 %v863, 4294901760
        %v1028 = vsub.f32 %v863, %v1027
        %v1029 = vand.u32 %v1028, 4294901760
        %v1030 = vsub.f32 %v1028, %v1029
        %v1031 = vand.u32 %v1030, 4294901760
        %1032 = vmatpush1.msra.mxu0 %v1031
        %1033 = vmatprep.subr.mxu0 0.0
        %v1034 = vand.u32 %v864, 4294901760
        %v1035 = vsub.f32 %v864, %v1034
        %v1036 = vand.u32 %v1035, 4294901760
        %v1037 = vsub.f32 %v1035, %v1036
        %v1038 = vand.u32 %v1037, 4294901760
        %1039 = vmatpush1.msra.mxu0 %v1038
        %1040 = vmatprep.subr.mxu0 0.0
        %v1041 = vand.u32 %v865, 4294901760
        %v1042 = vsub.f32 %v865, %v1041
        %v1043 = vand.u32 %v1042, 4294901760
        %v1044 = vsub.f32 %v1042, %v1043
        %v1045 = vand.u32 %v1044, 4294901760
        %1046 = vmatpush1.msra.mxu0 %v1045
        %1047 = vmatprep.subr.mxu0 0.0
        %v1048 = vand.u32 %v866, 4294901760
        %v1049 = vsub.f32 %v866, %v1048
        %v1050 = vand.u32 %v1049, 4294901760
        %v1051 = vsub.f32 %v1049, %v1050
        %v1052 = vand.u32 %v1051, 4294901760
        %1053 = vmatpush1.msra.mxu0 %v1052
        %1054 = vmatprep.subr.mxu0 0.0
        %v1055 = vand.u32 %v890, 4294901760
        %v1056 = vsub.f32 %v890, %v1055
        %v1057 = vand.u32 %v1056, 4294901760
        %v1058 = vsub.f32 %v1056, %v1057
        %v1059 = vand.u32 %v1058, 4294901760
        %1060 = vmatpush1.msra.mxu0 %v1059
        %1061 = vmatprep.subr.mxu0 0.0
        %1062 = vmatpush1.msra.mxu0 0.0
        %1063 = vmatprep.subr.mxu0 0.0
        %1064 = vmatpush1.msra.mxu0 0.0
        %1065 = vmatprep.subr.mxu0 0.0
        %1066 = vmatpush1.msra.mxu0 0.0
        %1067 = vmatprep.subr.mxu0 0.0
        %1068 = vmatpush1.msra.mxu0 0.0
        %1069 = vmatprep.subr.mxu0 0.0
        %1070 = vmatpush1.msra.mxu0 0.0
        %1071 = vmatprep.subr.mxu0 0.0
        %1072 = vmatpush1.msra.mxu0 0.0
        %1073 = vmatprep.subr.mxu0 0.0
        %1074 = vmatpush1.msra.mxu0 0.0
        %1075 = vmatprep.subr.mxu0 0.0
        %1076 = vmatpush1.msra.mxu0 0.0
        %1077 = vmatprep.subr.mxu0 0.0
        %1078 = vmatpush1.msra.mxu0 0.0
        %1079 = vmatprep.subr.mxu0 0.0
        %1080 = vmatpush1.msra.mxu0 0.0
        %1081 = vmatprep.subr.mxu0 0.0
        %1082 = vmatpush1.msra.mxu0 0.0
        %1083 = vmatprep.subr.mxu0 0.0
        %1084 = vmatpush1.msra.mxu0 0.0
        %1085 = vmatprep.subr.mxu0 0.0
        %1086 = vmatpush1.msra.mxu0 0.0
        %1087 = vmatprep.subr.mxu0 0.0
        %1088 = vmatpush1.msra.mxu0 0.0
        %1089 = vmatprep.subr.mxu0 0.0
        %1090 = vmatpush1.msra.mxu0 0.0
        %1091 = vmatprep.subr.mxu0 0.0
        %1092 = vmatpush1.msra.mxu0 0.0
        %1093 = vmatprep.subr.mxu0 0.0
        %1094 = vmatpush1.msra.mxu0 0.0
        %1095 = vmatprep.subr.mxu0 0.0
        %1096 = vmatpush1.msra.mxu0 0.0
        %1097 = vmatprep.subr.mxu0 0.0
        %1098 = vmatpush1.msra.mxu0 0.0
        %1099 = vmatprep.subr.mxu0 0.0
        %1100 = vmatpush1.msra.mxu0 0.0
        %1101 = vmatprep.subr.mxu0 0.0
        %1102 = vmatpush1.msra.mxu0 0.0
        %1103 = vmatprep.subr.mxu0 0.0
        %1104 = vmatpush1.msra.mxu0 0.0
        %1105 = vmatprep.subr.mxu0 0.0
        %1106 = vmatpush1.msra.mxu0 0.0
        %1107 = vmatprep.subr.mxu0 0.0
        %1108 = vmatpush1.msra.mxu0 0.0
        %1109 = vmatprep.mubr.f32.mxu0 0.0
        %v1110 = vand.u32 %v877, 4294901760
        %1111 = vmatmul.mubr.f32.gmra.mrb[0].mxu0 %v1110
        %v1112 = vpop.f32.mrb[0].mxu0
        %v1113 = vadd.f32 %v972, %v1112
        %v1114 = vpop.f32.mrb[0].mxu0
        %1115 = vmatprep.mubr.f32.mxu0 0.0
        %v1116 = vand.u32 %v880, 4294901760
        %1117 = vmatmul.mubr.f32.gmra.mrb[0].mxu0 %v1116
        %v1118 = vpop.f32.mrb[0].mxu0
        %v1119 = vadd.f32 %v982, %v1118
        %v1120 = vpop.f32.mrb[0].mxu0
        %1121 = vmatprep.mubr.f32.mxu0 0.0
        %v1122 = vand.u32 %v883, 4294901760
        %1123 = vmatmul.mubr.f32.gmra.mrb[0].mxu0 %v1122
        %v1124 = vpop.f32.mrb[0].mxu0
        %v1125 = vadd.f32 %v992, %v1124
        %v1126 = vpop.f32.mrb[0].mxu0
        %1127 = vmatprep.mubr.f32.mxu0 0.0
        %v1128 = vand.u32 %v886, 4294901760
        %1129 = vmatmul.mubr.f32.gmra.mrb[0].mxu0 %v1128
        %v1130 = vpop.f32.mrb[0].mxu0
        %v1131 = vadd.f32 %v1002, %v1130
        %v1132 = vpop.f32.mrb[0].mxu0
        %1133 = vdwg.mxu0
        %1134 = vmatprep.subr.mxu0 0.0
        %v1135 = vand.u32 %v860, 4294901760
        %v1136 = vsub.f32 %v860, %v1135
        %1137 = vmatpush1.msra.mxu0 %v1136
        %1138 = vmatprep.subr.mxu0 0.0
        %v1139 = vand.u32 %v861, 4294901760
        %v1140 = vsub.f32 %v861, %v1139
        %1141 = vmatpush1.msra.mxu0 %v1140
        %1142 = vmatprep.subr.mxu0 0.0
        %v1143 = vand.u32 %v862, 4294901760
        %v1144 = vsub.f32 %v862, %v1143
        %1145 = vmatpush1.msra.mxu0 %v1144
        %1146 = vmatprep.subr.mxu0 0.0
        %v1147 = vand.u32 %v863, 4294901760
        %v1148 = vsub.f32 %v863, %v1147
        %1149 = vmatpush1.msra.mxu0 %v1148
        %1150 = vmatprep.subr.mxu0 0.0
        %v1151 = vand.u32 %v864, 4294901760
        %v1152 = vsub.f32 %v864, %v1151
        %1153 = vmatpush1.msra.mxu0 %v1152
        %1154 = vmatprep.subr.mxu0 0.0
        %v1155 = vand.u32 %v865, 4294901760
        %v1156 = vsub.f32 %v865, %v1155
        %1157 = vmatpush1.msra.mxu0 %v1156
        %1158 = vmatprep.subr.mxu0 0.0
        %v1159 = vand.u32 %v866, 4294901760
        %v1160 = vsub.f32 %v866, %v1159
        %1161 = vmatpush1.msra.mxu0 %v1160
        %1162 = vmatprep.subr.mxu0 0.0
        %v1163 = vand.u32 %v890, 4294901760
        %v1164 = vsub.f32 %v890, %v1163
        %1165 = vmatpush1.msra.mxu0 %v1164
        %1166 = vmatprep.subr.mxu0 0.0
        %1167 = vmatpush1.msra.mxu0 0.0
        %1168 = vmatprep.subr.mxu0 0.0
        %1169 = vmatpush1.msra.mxu0 0.0
        %1170 = vmatprep.subr.mxu0 0.0
        %1171 = vmatpush1.msra.mxu0 0.0
        %1172 = vmatprep.subr.mxu0 0.0
        %1173 = vmatpush1.msra.mxu0 0.0
        %1174 = vmatprep.subr.mxu0 0.0
        %1175 = vmatpush1.msra.mxu0 0.0
        %1176 = vmatprep.subr.mxu0 0.0
        %1177 = vmatpush1.msra.mxu0 0.0
        %1178 = vmatprep.subr.mxu0 0.0
        %1179 = vmatpush1.msra.mxu0 0.0
        %1180 = vmatprep.subr.mxu0 0.0
        %1181 = vmatpush1.msra.mxu0 0.0
        %1182 = vmatprep.subr.mxu0 0.0
        %1183 = vmatpush1.msra.mxu0 0.0
        %1184 = vmatprep.subr.mxu0 0.0
        %1185 = vmatpush1.msra.mxu0 0.0
        %1186 = vmatprep.subr.mxu0 0.0
        %1187 = vmatpush1.msra.mxu0 0.0
        %1188 = vmatprep.subr.mxu0 0.0
        %1189 = vmatpush1.msra.mxu0 0.0
        %1190 = vmatprep.subr.mxu0 0.0
        %1191 = vmatpush1.msra.mxu0 0.0
        %1192 = vmatprep.subr.mxu0 0.0
        %1193 = vmatpush1.msra.mxu0 0.0
        %1194 = vmatprep.subr.mxu0 0.0
        %1195 = vmatpush1.msra.mxu0 0.0
        %1196 = vmatprep.subr.mxu0 0.0
        %1197 = vmatpush1.msra.mxu0 0.0
        %1198 = vmatprep.subr.mxu0 0.0
        %1199 = vmatpush1.msra.mxu0 0.0
        %1200 = vmatprep.subr.mxu0 0.0
        %1201 = vmatpush1.msra.mxu0 0.0
        %1202 = vmatprep.subr.mxu0 0.0
        %1203 = vmatpush1.msra.mxu0 0.0
        %1204 = vmatprep.subr.mxu0 0.0
        %1205 = vmatpush1.msra.mxu0 0.0
        %1206 = vmatprep.subr.mxu0 0.0
        %1207 = vmatpush1.msra.mxu0 0.0
        %1208 = vmatprep.subr.mxu0 0.0
        %1209 = vmatpush1.msra.mxu0 0.0
        %1210 = vmatprep.subr.mxu0 0.0
        %1211 = vmatpush1.msra.mxu0 0.0
        %1212 = vmatprep.subr.mxu0 0.0
        %1213 = vmatpush1.msra.mxu0 0.0
        %1214 = vmatprep.mubr.f32.mxu0 0.0
        %v1215 = vand.u32 %v877, 4294901760
        %v1216 = vsub.f32 %v877, %v1215
        %1217 = vmatmul.mubr.f32.gmra.mrb[0].mxu0 %v1216
        %v1218 = vpop.f32.mrb[0].mxu0
        %v1219 = vadd.f32 %v1113, %v1218
        %v1220 = vpop.f32.mrb[0].mxu0
        %1221 = vmatprep.mubr.f32.mxu0 0.0
        %v1222 = vand.u32 %v880, 4294901760
        %v1223 = vsub.f32 %v880, %v1222
        %1224 = vmatmul.mubr.f32.gmra.mrb[0].mxu0 %v1223
        %v1225 = vpop.f32.mrb[0].mxu0
        %v1226 = vadd.f32 %v1119, %v1225
        %v1227 = vpop.f32.mrb[0].mxu0
        %1228 = vmatprep.mubr.f32.mxu0 0.0
        %v1229 = vand.u32 %v883, 4294901760
        %v1230 = vsub.f32 %v883, %v1229
        %1231 = vmatmul.mubr.f32.gmra.mrb[0].mxu0 %v1230
        %v1232 = vpop.f32.mrb[0].mxu0
        %v1233 = vadd.f32 %v1125, %v1232
        %v1234 = vpop.f32.mrb[0].mxu0
        %1235 = vmatprep.mubr.f32.mxu0 0.0
        %v1236 = vand.u32 %v886, 4294901760
        %v1237 = vsub.f32 %v886, %v1236
        %1238 = vmatmul.mubr.f32.gmra.mrb[0].mxu0 %v1237
        %v1239 = vpop.f32.mrb[0].mxu0
        %v1240 = vadd.f32 %v1131, %v1239
        %v1241 = vpop.f32.mrb[0].mxu0
        %1242 = vdwg.mxu0
        %1243 = vmatprep.subr.mxu0 0.0
        %v1244 = vand.u32 %v860, 4294901760
        %1245 = vmatpush1.msra.mxu0 %v1244
        %1246 = vmatprep.subr.mxu0 0.0
        %v1247 = vand.u32 %v861, 4294901760
        %1248 = vmatpush1.msra.mxu0 %v1247
        %1249 = vmatprep.subr.mxu0 0.0
        %v1250 = vand.u32 %v862, 4294901760
        %1251 = vmatpush1.msra.mxu0 %v1250
        %1252 = vmatprep.subr.mxu0 0.0
        %v1253 = vand.u32 %v863, 4294901760
        %1254 = vmatpush1.msra.mxu0 %v1253
        %1255 = vmatprep.subr.mxu0 0.0
        %v1256 = vand.u32 %v864, 4294901760
        %1257 = vmatpush1.msra.mxu0 %v1256
        %1258 = vmatprep.subr.mxu0 0.0
        %v1259 = vand.u32 %v865, 4294901760
        %1260 = vmatpush1.msra.mxu0 %v1259
        %1261 = vmatprep.subr.mxu0 0.0
        %v1262 = vand.u32 %v866, 4294901760
        %1263 = vmatpush1.msra.mxu0 %v1262
        %1264 = vmatprep.subr.mxu0 0.0
        %v1265 = vand.u32 %v890, 4294901760
        %1266 = vmatpush1.msra.mxu0 %v1265
        %1267 = vmatprep.subr.mxu0 0.0
        %1268 = vmatpush1.msra.mxu0 0.0
        %1269 = vmatprep.subr.mxu0 0.0
        %1270 = vmatpush1.msra.mxu0 0.0
        %1271 = vmatprep.subr.mxu0 0.0
        %1272 = vmatpush1.msra.mxu0 0.0
        %1273 = vmatprep.subr.mxu0 0.0
        %1274 = vmatpush1.msra.mxu0 0.0
        %1275 = vmatprep.subr.mxu0 0.0
        %1276 = vmatpush1.msra.mxu0 0.0
        %1277 = vmatprep.subr.mxu0 0.0
        %1278 = vmatpush1.msra.mxu0 0.0
        %1279 = vmatprep.subr.mxu0 0.0
        %1280 = vmatpush1.msra.mxu0 0.0
        %1281 = vmatprep.subr.mxu0 0.0
        %1282 = vmatpush1.msra.mxu0 0.0
        %1283 = vmatprep.subr.mxu0 0.0
        %1284 = vmatpush1.msra.mxu0 0.0
        %1285 = vmatprep.subr.mxu0 0.0
        %1286 = vmatpush1.msra.mxu0 0.0
        %1287 = vmatprep.subr.mxu0 0.0
        %1288 = vmatpush1.msra.mxu0 0.0
        %1289 = vmatprep.subr.mxu0 0.0
        %1290 = vmatpush1.msra.mxu0 0.0
        %1291 = vmatprep.subr.mxu0 0.0
        %1292 = vmatpush1.msra.mxu0 0.0
        %1293 = vmatprep.subr.mxu0 0.0
        %1294 = vmatpush1.msra.mxu0 0.0
        %1295 = vmatprep.subr.mxu0 0.0
        %1296 = vmatpush1.msra.mxu0 0.0
        %1297 = vmatprep.subr.mxu0 0.0
        %1298 = vmatpush1.msra.mxu0 0.0
        %1299 = vmatprep.subr.mxu0 0.0
        %1300 = vmatpush1.msra.mxu0 0.0
        %1301 = vmatprep.subr.mxu0 0.0
        %1302 = vmatpush1.msra.mxu0 0.0
        %1303 = vmatprep.subr.mxu0 0.0
        %1304 = vmatpush1.msra.mxu0 0.0
        %1305 = vmatprep.subr.mxu0 0.0
        %1306 = vmatpush1.msra.mxu0 0.0
        %1307 = vmatprep.subr.mxu0 0.0
        %1308 = vmatpush1.msra.mxu0 0.0
        %1309 = vmatprep.subr.mxu0 0.0
        %1310 = vmatpush1.msra.mxu0 0.0
        %1311 = vmatprep.subr.mxu0 0.0
        %1312 = vmatpush1.msra.mxu0 0.0
        %1313 = vmatprep.subr.mxu0 0.0
        %1314 = vmatpush1.msra.mxu0 0.0
        %1315 = vmatprep.mubr.f32.mxu0 0.0
        %v1316 = vand.u32 %v877, 4294901760
        %v1317 = vsub.f32 %v877, %v1316
        %v1318 = vand.u32 %v1317, 4294901760
        %1319 = vmatmul.mubr.f32.gmra.mrb[0].mxu0 %v1318
        %v1320 = vpop.f32.mrb[0].mxu0
        %v1321 = vadd.f32 %v1219, %v1320
        %v1322 = vpop.f32.mrb[0].mxu0
        %1323 = vmatprep.mubr.f32.mxu0 0.0
        %v1324 = vand.u32 %v880, 4294901760
        %v1325 = vsub.f32 %v880, %v1324
        %v1326 = vand.u32 %v1325, 4294901760
        %1327 = vmatmul.mubr.f32.gmra.mrb[0].mxu0 %v1326
        %v1328 = vpop.f32.mrb[0].mxu0
        %v1329 = vadd.f32 %v1226, %v1328
        %v1330 = vpop.f32.mrb[0].mxu0
        %1331 = vmatprep.mubr.f32.mxu0 0.0
        %v1332 = vand.u32 %v883, 4294901760
        %v1333 = vsub.f32 %v883, %v1332
        %v1334 = vand.u32 %v1333, 4294901760
        %1335 = vmatmul.mubr.f32.gmra.mrb[0].mxu0 %v1334
        %v1336 = vpop.f32.mrb[0].mxu0
        %v1337 = vadd.f32 %v1233, %v1336
        %v1338 = vpop.f32.mrb[0].mxu0
        %1339 = vmatprep.mubr.f32.mxu0 0.0
        %v1340 = vand.u32 %v886, 4294901760
        %v1341 = vsub.f32 %v886, %v1340
        %v1342 = vand.u32 %v1341, 4294901760
        %1343 = vmatmul.mubr.f32.gmra.mrb[0].mxu0 %v1342
        %v1344 = vpop.f32.mrb[0].mxu0
        %v1345 = vadd.f32 %v1240, %v1344
        %v1346 = vpop.f32.mrb[0].mxu0
        %1347 = vdwg.mxu0
        %1348 = vmatprep.subr.mxu0 0.0
        %v1349 = vand.u32 %v860, 4294901760
        %v1350 = vsub.f32 %v860, %v1349
        %v1351 = vand.u32 %v1350, 4294901760
        %1352 = vmatpush1.msra.mxu0 %v1351
        %1353 = vmatprep.subr.mxu0 0.0
        %v1354 = vand.u32 %v861, 4294901760
        %v1355 = vsub.f32 %v861, %v1354
        %v1356 = vand.u32 %v1355, 4294901760
        %1357 = vmatpush1.msra.mxu0 %v1356
        %1358 = vmatprep.subr.mxu0 0.0
        %v1359 = vand.u32 %v862, 4294901760
        %v1360 = vsub.f32 %v862, %v1359
        %v1361 = vand.u32 %v1360, 4294901760
        %1362 = vmatpush1.msra.mxu0 %v1361
        %1363 = vmatprep.subr.mxu0 0.0
        %v1364 = vand.u32 %v863, 4294901760
        %v1365 = vsub.f32 %v863, %v1364
        %v1366 = vand.u32 %v1365, 4294901760
        %1367 = vmatpush1.msra.mxu0 %v1366
        %1368 = vmatprep.subr.mxu0 0.0
        %v1369 = vand.u32 %v864, 4294901760
        %v1370 = vsub.f32 %v864, %v1369
        %v1371 = vand.u32 %v1370, 4294901760
        %1372 = vmatpush1.msra.mxu0 %v1371
        %1373 = vmatprep.subr.mxu0 0.0
        %v1374 = vand.u32 %v865, 4294901760
        %v1375 = vsub.f32 %v865, %v1374
        %v1376 = vand.u32 %v1375, 4294901760
        %1377 = vmatpush1.msra.mxu0 %v1376
        %1378 = vmatprep.subr.mxu0 0.0
        %v1379 = vand.u32 %v866, 4294901760
        %v1380 = vsub.f32 %v866, %v1379
        %v1381 = vand.u32 %v1380, 4294901760
        %1382 = vmatpush1.msra.mxu0 %v1381
        %1383 = vmatprep.subr.mxu0 0.0
        %v1384 = vand.u32 %v890, 4294901760
        %v1385 = vsub.f32 %v890, %v1384
        %v1386 = vand.u32 %v1385, 4294901760
        %1387 = vmatpush1.msra.mxu0 %v1386
        %1388 = vmatprep.subr.mxu0 0.0
        %1389 = vmatpush1.msra.mxu0 0.0
        %1390 = vmatprep.subr.mxu0 0.0
        %1391 = vmatpush1.msra.mxu0 0.0
        %1392 = vmatprep.subr.mxu0 0.0
        %1393 = vmatpush1.msra.mxu0 0.0
        %1394 = vmatprep.subr.mxu0 0.0
        %1395 = vmatpush1.msra.mxu0 0.0
        %1396 = vmatprep.subr.mxu0 0.0
        %1397 = vmatpush1.msra.mxu0 0.0
        %1398 = vmatprep.subr.mxu0 0.0
        %1399 = vmatpush1.msra.mxu0 0.0
        %1400 = vmatprep.subr.mxu0 0.0
        %1401 = vmatpush1.msra.mxu0 0.0
        %1402 = vmatprep.subr.mxu0 0.0
        %1403 = vmatpush1.msra.mxu0 0.0
        %1404 = vmatprep.subr.mxu0 0.0
        %1405 = vmatpush1.msra.mxu0 0.0
        %1406 = vmatprep.subr.mxu0 0.0
        %1407 = vmatpush1.msra.mxu0 0.0
        %1408 = vmatprep.subr.mxu0 0.0
        %1409 = vmatpush1.msra.mxu0 0.0
        %1410 = vmatprep.subr.mxu0 0.0
        %1411 = vmatpush1.msra.mxu0 0.0
        %1412 = vmatprep.subr.mxu0 0.0
        %1413 = vmatpush1.msra.mxu0 0.0
        %1414 = vmatprep.subr.mxu0 0.0
        %1415 = vmatpush1.msra.mxu0 0.0
        %1416 = vmatprep.subr.mxu0 0.0
        %1417 = vmatpush1.msra.mxu0 0.0
        %1418 = vmatprep.subr.mxu0 0.0
        %1419 = vmatpush1.msra.mxu0 0.0
        %1420 = vmatprep.subr.mxu0 0.0
        %1421 = vmatpush1.msra.mxu0 0.0
        %1422 = vmatprep.subr.mxu0 0.0
        %1423 = vmatpush1.msra.mxu0 0.0
        %1424 = vmatprep.subr.mxu0 0.0
        %1425 = vmatpush1.msra.mxu0 0.0
        %1426 = vmatprep.subr.mxu0 0.0
        %1427 = vmatpush1.msra.mxu0 0.0
        %1428 = vmatprep.subr.mxu0 0.0
        %1429 = vmatpush1.msra.mxu0 0.0
        %1430 = vmatprep.subr.mxu0 0.0
        %1431 = vmatpush1.msra.mxu0 0.0
        %1432 = vmatprep.subr.mxu0 0.0
        %1433 = vmatpush1.msra.mxu0 0.0
        %1434 = vmatprep.subr.mxu0 0.0
        %1435 = vmatpush1.msra.mxu0 0.0
        %1436 = vmatprep.mubr.f32.mxu0 0.0
        %v1437 = vand.u32 %v877, 4294901760
        %1438 = vmatmul.mubr.f32.gmra.mrb[0].mxu0 %v1437
        %v1439 = vpop.f32.mrb[0].mxu0
        %v1440 = vadd.f32 %v1321, %v1439
        %v1441 = vpop.f32.mrb[0].mxu0
        %1442 = vmatprep.mubr.f32.mxu0 0.0
        %v1443 = vand.u32 %v880, 4294901760
        %1444 = vmatmul.mubr.f32.gmra.mrb[0].mxu0 %v1443
        %v1445 = vpop.f32.mrb[0].mxu0
        %v1446 = vadd.f32 %v1329, %v1445
        %v1447 = vpop.f32.mrb[0].mxu0
        %1448 = vmatprep.mubr.f32.mxu0 0.0
        %v1449 = vand.u32 %v883, 4294901760
        %1450 = vmatmul.mubr.f32.gmra.mrb[0].mxu0 %v1449
        %v1451 = vpop.f32.mrb[0].mxu0
        %v1452 = vadd.f32 %v1337, %v1451
        %v1453 = vpop.f32.mrb[0].mxu0
        %1454 = vmatprep.mubr.f32.mxu0 0.0
        %v1455 = vand.u32 %v886, 4294901760
        %1456 = vmatmul.mubr.f32.gmra.mrb[0].mxu0 %v1455
        %v1457 = vpop.f32.mrb[0].mxu0
        %v1458 = vadd.f32 %v1345, %v1457
        %v1459 = vpop.f32.mrb[0].mxu0
        %1460 = vdwg.mxu0
        %1461 = vmatprep.subr.mxu0 0.0
        %v1462 = vand.u32 %v860, 4294901760
        %1463 = vmatpush1.msra.mxu0 %v1462
        %1464 = vmatprep.subr.mxu0 0.0
        %v1465 = vand.u32 %v861, 4294901760
        %1466 = vmatpush1.msra.mxu0 %v1465
        %1467 = vmatprep.subr.mxu0 0.0
        %v1468 = vand.u32 %v862, 4294901760
        %1469 = vmatpush1.msra.mxu0 %v1468
        %1470 = vmatprep.subr.mxu0 0.0
        %v1471 = vand.u32 %v863, 4294901760
        %1472 = vmatpush1.msra.mxu0 %v1471
        %1473 = vmatprep.subr.mxu0 0.0
        %v1474 = vand.u32 %v864, 4294901760
        %1475 = vmatpush1.msra.mxu0 %v1474
        %1476 = vmatprep.subr.mxu0 0.0
        %v1477 = vand.u32 %v865, 4294901760
        %1478 = vmatpush1.msra.mxu0 %v1477
        %1479 = vmatprep.subr.mxu0 0.0
        %v1480 = vand.u32 %v866, 4294901760
        %1481 = vmatpush1.msra.mxu0 %v1480
        %1482 = vmatprep.subr.mxu0 0.0
        %v1483 = vand.u32 %v890, 4294901760
        %1484 = vmatpush1.msra.mxu0 %v1483
        %1485 = vmatprep.subr.mxu0 0.0
        %1486 = vmatpush1.msra.mxu0 0.0
        %1487 = vmatprep.subr.mxu0 0.0
        %1488 = vmatpush1.msra.mxu0 0.0
        %1489 = vmatprep.subr.mxu0 0.0
        %1490 = vmatpush1.msra.mxu0 0.0
        %1491 = vmatprep.subr.mxu0 0.0
        %1492 = vmatpush1.msra.mxu0 0.0
        %1493 = vmatprep.subr.mxu0 0.0
        %1494 = vmatpush1.msra.mxu0 0.0
        %1495 = vmatprep.subr.mxu0 0.0
        %1496 = vmatpush1.msra.mxu0 0.0
        %1497 = vmatprep.subr.mxu0 0.0
        %1498 = vmatpush1.msra.mxu0 0.0
        %1499 = vmatprep.subr.mxu0 0.0
        %1500 = vmatpush1.msra.mxu0 0.0
        %1501 = vmatprep.subr.mxu0 0.0
        %1502 = vmatpush1.msra.mxu0 0.0
        %1503 = vmatprep.subr.mxu0 0.0
        %1504 = vmatpush1.msra.mxu0 0.0
        %1505 = vmatprep.subr.mxu0 0.0
        %1506 = vmatpush1.msra.mxu0 0.0
        %1507 = vmatprep.subr.mxu0 0.0
        %1508 = vmatpush1.msra.mxu0 0.0
        %1509 = vmatprep.subr.mxu0 0.0
        %1510 = vmatpush1.msra.mxu0 0.0
        %1511 = vmatprep.subr.mxu0 0.0
        %1512 = vmatpush1.msra.mxu0 0.0
        %1513 = vmatprep.subr.mxu0 0.0
        %1514 = vmatpush1.msra.mxu0 0.0
        %1515 = vmatprep.subr.mxu0 0.0
        %1516 = vmatpush1.msra.mxu0 0.0
        %1517 = vmatprep.subr.mxu0 0.0
        %1518 = vmatpush1.msra.mxu0 0.0
        %1519 = vmatprep.subr.mxu0 0.0
        %1520 = vmatpush1.msra.mxu0 0.0
        %1521 = vmatprep.subr.mxu0 0.0
        %1522 = vmatpush1.msra.mxu0 0.0
        %1523 = vmatprep.subr.mxu0 0.0
        %1524 = vmatpush1.msra.mxu0 0.0
        %1525 = vmatprep.subr.mxu0 0.0
        %1526 = vmatpush1.msra.mxu0 0.0
        %1527 = vmatprep.subr.mxu0 0.0
        %1528 = vmatpush1.msra.mxu0 0.0
        %1529 = vmatprep.subr.mxu0 0.0
        %1530 = vmatpush1.msra.mxu0 0.0
        %1531 = vmatprep.subr.mxu0 0.0
        %1532 = vmatpush1.msra.mxu0 0.0
        %1533 = vmatprep.mubr.f32.mxu0 0.0
        %v1534 = vand.u32 %v877, 4294901760
        %1535 = vmatmul.mubr.f32.gmra.mrb[0].mxu0 %v1534
        %v1536 = vpop.f32.mrb[0].mxu0
        %v1537 = vadd.f32 %v1440, %v1536
        %v1538 = vpop.f32.mrb[0].mxu0
        %1539 = vmatprep.mubr.f32.mxu0 0.0
        %v1540 = vand.u32 %v880, 4294901760
        %1541 = vmatmul.mubr.f32.gmra.mrb[0].mxu0 %v1540
        %v1542 = vpop.f32.mrb[0].mxu0
        %v1543 = vadd.f32 %v1446, %v1542
        %v1544 = vpop.f32.mrb[0].mxu0
        %1545 = vmatprep.mubr.f32.mxu0 0.0
        %v1546 = vand.u32 %v883, 4294901760
        %1547 = vmatmul.mubr.f32.gmra.mrb[0].mxu0 %v1546
        %v1548 = vpop.f32.mrb[0].mxu0
        %v1549 = vadd.f32 %v1452, %v1548
        %v1550 = vpop.f32.mrb[0].mxu0
        %1551 = vmatprep.mubr.f32.mxu0 0.0
        %v1552 = vand.u32 %v886, 4294901760
        %1553 = vmatmul.mubr.f32.gmra.mrb[0].mxu0 %v1552
        %v1554 = vpop.f32.mrb[0].mxu0
        %v1555 = vadd.f32 %v1458, %v1554
        %v1556 = vpop.f32.mrb[0].mxu0
        %1557 = vdwg.mxu0
        %vm1558 = vcmask 982016
        %1559 = vst.msk [vmem:[%s218] sm:$0xff] %vm1558, %v1537
        %1560 = vst.msk [vmem:[%s218 + $0x8] sm:$0xff] %vm1558, %v1543
        %1561 = vst.msk [vmem:[%s218 + $0x10] sm:$0xff] %vm1558, %v1549
        %1562 = vst.msk [vmem:[%s218 + $0x18] sm:$0xff] %vm1558, %v1555
        %s1563 = sand.u32 %s137, 1
        %s1564 = scalar_lea.sflag [#allocation3], %s1563
        %s1565 = sand.u32 %s137, 1
        %s1566 = smul.addr %s1565, 32
        %s1567 = scalar_lea.vmem [#allocation2], %s1566
        // Predicated region
        $region41: #{tpu_custom_call.1} parent=39 // pred_check
          %p1568 = pneg %p147
        $region42: #{tpu_custom_call.1} parent=39 // pred_check_branch
          %1570 = sbr.rel (%p1568) target = $region44
        $region43: #{tpu_custom_call.1} parent=39 // pred_region
          %s1571 = smul.u32 4, %s19
          %s1573 = ssub.s32 512, 512
          %1574 = vsyncadd %s1564, %s1573
          %s1575 = smul.addr %s1571, 128
          %s1576 = scalar_lea.hbm %s5, %s1575
          %s1577 = sshll.u32 %s1567, 4
          %s1578 = int_to_ptr.vmem [resolvable:$true] %s1577
          %1583 = dma.vmem_to_hbm [thread:$0]  %s1578, 512, %s1576, %s1564, 128, 128, 8
        $region44: #{tpu_custom_call.1} parent=39 // pred_fallthru
          _
      $region40: #{tpu_custom_call.1} parent=5 // pred_fallthru
        _
      %p1584 = scmp.le.s32.totalorder 2, %s14
      // Predicated region
      $region45: #{tpu_custom_call.1} parent=5 // pred_check
        %p1585 = pneg %p1584
      $region46: #{tpu_custom_call.1} parent=5 // pred_check_branch
        %1587 = sbr.rel (%p1585) target = $region48
      $region47: #{tpu_custom_call.1} parent=5 // pred_region
        %s1588 = ssub.s32 %s14, 2
        // Predicated region
        $region49: #{tpu_custom_call.1} parent=47 // pred_check
          %p1589 = pneg %p153
        $region50: #{tpu_custom_call.1} parent=47 // pred_check_branch
          %1591 = sbr.rel (%p1589) target = $region52
        $region51: #{tpu_custom_call.1} parent=47 // pred_region
          %s1592 = sand.u32 %s138, 1
          %s1593 = scalar_lea.sflag [#allocation3], %s1592
          %s1594 = sand.u32 %s138, 1
          %s1595 = smul.addr %s1594, 32
          %s1596 = scalar_lea.vmem [#allocation2], %s1595
          %1597 = dma.done %s1593, 512
        $region52: #{tpu_custom_call.1} parent=47 // pred_fallthru
          _
      $region48: #{tpu_custom_call.1} parent=5 // pred_fallthru
        _
    $region6: #{tpu_custom_call.1} parent=1 // loop_footer
      %s18 = sadd.s32 1, %s14
    $region7: #{tpu_custom_call.1} parent=1 // loop_footer_branch
      %13 = sbr.rel target = $region3
    $region8: #{tpu_custom_call.1} parent=1 // loop_exit
      _
    %1598 = vsyncpa [#allocation3], 1
    %s1599 = scalar_lea.sflag [#allocation3], 1
    %1600 = vsyncpa %s1599, 1

</llo_original>
